<compile_context>
chip_gen: v5e
topology: v5e:2x2
jax: 0.10.0
libtpu: 0.0.40
codegen_flags: <defaults>
</compile_context>

<pallas_src>
import functools
import math

import jax
import jax.numpy as jnp
from jax.experimental import pallas as pl
from jax.experimental.pallas import tpu as pltpu


def _layernorm(x, gamma, beta, eps=1e-5):
    # PyTorch nn.LayerNorm: biased variance, eps inside the sqrt.
    mu = jnp.mean(x, axis=-1, keepdims=True)
    var = jnp.mean(jnp.square(x - mu), axis=-1, keepdims=True)
    return (x - mu) * jax.lax.rsqrt(var + eps) * gamma + beta


def encoder_kernel(x_ref, bias_ref,
                   wqkv_ref, bqkv_ref, wo_ref, bo_ref, g1_ref, be1_ref,
                   w1_ref, b1_ref, w2_ref, b2_ref, g2_ref, be2_ref,
                   gf_ref, bf_ref,
                   o_ref, resid_ref, *, head, d_k, d_v):
    l = pl.program_id(1)
    n_layers = pl.num_programs(1)
    tb, seq, _ = bias_ref.shape          # batch tile, sequence length
    m, d_model = x_ref.shape             # m = tb * seq (rows of the big matmuls)
    g = 2 * d_k + d_v                    # per-head fused [q|k|v] group width
    hv = head * d_v

    # Load the input activations into the residual carry at the first layer step
    # of this batch tile; afterwards the residual lives in VMEM scratch only.
    @pl.when(l == 0)
    def _():
        resid_ref[...] = x_ref[...]

    x = resid_ref[...]                                        # (m, d_model) f32

    # ---- fused, head-grouped QKV projection: one MXU matmul over all rows ----
    qkv = jnp.dot(x, wqkv_ref[0], preferred_element_type=jnp.float32) + bqkv_ref[0]

    # Head-major relayout: H static slices (q columns pre-scaled by 1/sqrt(d_k) host-side).
    blk = jnp.concatenate(
        [qkv[:, h * g:(h + 1) * g].reshape(tb, seq, g) for h in range(head)],
        axis=0)                                               # (head*tb, seq, g)
    q3 = blk[:, :, :d_k]
    k3 = blk[:, :, d_k:2 * d_k]
    v3 = blk[:, :, 2 * d_k:]

    # ---- head-batched attention (leading-batch 3-D einsums, flash-kernel style) ----
    scores = jnp.einsum('bqd,bkd->bqk', q3, k3,
                        preferred_element_type=jnp.float32)   # (head*tb, seq, seq)
    scores = scores + jnp.concatenate([bias_ref[...]] * head, axis=0)
    mx = jnp.max(scores, axis=-1, keepdims=True)
    e = jnp.exp(scores - mx)
    attn = e * pl.reciprocal(jnp.sum(e, axis=-1, keepdims=True), approx=True)
    ctx3 = jnp.einsum('bqk,bkd->bqd', attn, v3,
                      preferred_element_type=jnp.float32)     # (head*tb, seq, d_v)

    ctx = jnp.concatenate(
        [ctx3[h * tb:(h + 1) * tb] for h in range(head)], axis=-1
    ).reshape(m, hv)                                          # (m, head*d_v)

    attn_out = jnp.dot(ctx, wo_ref[0], preferred_element_type=jnp.float32) + bo_ref[0]
    y = _layernorm(attn_out + x, g1_ref[0], be1_ref[0])

    # ---- position-wise FFN ----
    h1 = jnp.maximum(
        jnp.dot(y, w1_ref[0], preferred_element_type=jnp.float32) + b1_ref[0], 0.0)
    h2 = jnp.dot(h1, w2_ref[0], preferred_element_type=jnp.float32) + b2_ref[0]
    out = _layernorm(h2 + y, g2_ref[0], be2_ref[0])

    resid_ref[...] = out                                      # carry to the next layer step

    @pl.when(l == n_layers - 1)
    def _():
        o_ref[...] = _layernorm(out, gf_ref[...], bf_ref[...])


def pack_encoder_params(params, *, head, d_k, d_v):
    """One-time host-side re-parameterization: fused head-grouped QKV weight with the
    1/sqrt(d_k) scale folded into the Q columns, plus leading (1, ...) dims for biases."""
    L, d_model, _ = params["wq"].shape
    scale = jnp.float32(1.0 / math.sqrt(d_k))
    wq = params["wq"].reshape(L, d_model, head, d_k) * scale
    wk = params["wk"].reshape(L, d_model, head, d_k)
    wv = params["wv"].reshape(L, d_model, head, d_v)
    wqkv = jnp.concatenate([wq, wk, wv], axis=-1).reshape(
        L, d_model, head * (2 * d_k + d_v))
    bq = params["bq"].reshape(L, head, d_k) * scale
    bk = params["bk"].reshape(L, head, d_k)
    bv = params["bv"].reshape(L, head, d_v)
    bqkv = jnp.concatenate([bq, bk, bv], axis=-1).reshape(
        L, 1, head * (2 * d_k + d_v))
    return {
        "wqkv": wqkv, "bqkv": bqkv,
        "wo": params["wo"], "bo": params["bo"].reshape(L, 1, -1),
        "g1": params["g1"].reshape(L, 1, -1), "be1": params["be1"].reshape(L, 1, -1),
        "w1": params["w1"], "b1": params["b1"].reshape(L, 1, -1),
        "w2": params["w2"], "b2": params["b2"].reshape(L, 1, -1),
        "g2": params["g2"].reshape(L, 1, -1), "be2": params["be2"].reshape(L, 1, -1),
        "gf": params["gf"].reshape(1, -1), "bf": params["bf"].reshape(1, -1),
    }


def encoder_forward(x, attn_mask, packed, *, head, d_k, d_v, batch_tile=None):
    B, S, D = x.shape
    L = packed["wqkv"].shape[0]
    d_ff = packed["w1"].shape[-1]
    hv = head * d_v
    C = head * (2 * d_k + d_v)

    # Whole batch per grid step at small sizes; on v7x pick batch_tile = B//2 so the
    # "parallel" leading axis is split across the two TensorCores.
    if batch_tile is None:
        batch_tile = B
    assert B % batch_tile == 0
    nbt = B // batch_tile
    m = batch_tile * S

    x2 = x.astype(jnp.float32).reshape(B * S, D)
    # Additive mask bias (1.0 masked -> -1e9).
    # TODO(synk): for large S, pass a compact int8 mask / per-row lengths instead of an
    # f32 (B,S,S) bias to cut mask DMA traffic 4-16x.
    mask_bias = attn_mask.astype(jnp.float32) * jnp.float32(-1e9)

    def lspec(arr):
        nd = arr.ndim
        return pl.BlockSpec((1,) + tuple(arr.shape[1:]),
                            lambda bt, l, _z=(0,) * (nd - 1): (l,) + _z)

    layer_names = ("wqkv", "bqkv", "wo", "bo", "g1", "be1",
                   "w1", "b1", "w2", "b2", "g2", "be2")
    layer_ops = [packed[nm] for nm in layer_names]

    in_specs = (
        [pl.BlockSpec((m, D), lambda bt, l: (bt, 0)),
         pl.BlockSpec((batch_tile, S, S), lambda bt, l: (bt, 0, 0))]
        + [lspec(a) for a in layer_ops]
        + [pl.BlockSpec((1, D), lambda bt, l: (0, 0)),
           pl.BlockSpec((1, D), lambda bt, l: (0, 0))]
    )

    flops = L * B * (2 * S * D * C
                     + 2 * head * S * S * d_k
                     + 2 * head * S * S * d_v
                     + 2 * S * hv * D
                     + 4 * S * D * d_ff)
    transcendentals = L * B * (head * S * S + head * S + 2 * S) + B * S
    # Weights are re-streamed once per batch tile (layer grid axis).
    bytes_accessed = 4 * (2 * B * S * D + B * S * S
                          + nbt * sum(int(a.size) for a in layer_ops)
                          + int(packed["gf"].size) + int(packed["bf"].size))

    kern = functools.partial(encoder_kernel, head=head, d_k=d_k, d_v=d_v)
    out2 = pl.pallas_call(
        kern,
        out_shape=jax.ShapeDtypeStruct((B * S, D), jnp.float32),
        grid=(nbt, L),
        in_specs=in_specs,
        out_specs=pl.BlockSpec((m, D), lambda bt, l: (bt, 0)),
        scratch_shapes=[pltpu.VMEM((m, D), jnp.float32)],   # residual carry across layers
        compiler_params=pltpu.CompilerParams(
            dimension_semantics=("parallel", "arbitrary")),
        cost_estimate=pl.CostEstimate(flops=flops,
                                      transcendentals=transcendentals,
                                      bytes_accessed=bytes_accessed),
    )(x2, mask_bias, *layer_ops, packed["gf"], packed["bf"])
    return out2.reshape(B, S, D)


def init_encoder_params(key, d_model, head, d_k, d_v, d_ff, n_layers):
    s = 0.05

    def one_layer(k):
        ks = jax.random.split(k, 12)
        n = lambda kk, shape: s * jax.random.normal(kk, shape, jnp.float32)
        return {
            "wq": n(ks[0], (d_model, head * d_k)),
            "wk": n(ks[1], (d_model, head * d_k)),
            "wv": n(ks[2], (d_model, head * d_v)),
            "bq": n(ks[3], (head * d_k,)),
            "bk": n(ks[4], (head * d_k,)),
            "bv": n(ks[5], (head * d_v,)),
            "wo": n(ks[6], (head * d_v, d_model)),
            "bo": n(ks[7], (d_model,)),
            "g1": 1.0 + n(ks[8], (d_model,)),
            "be1": n(ks[9], (d_model,)),
            "w1": n(ks[10], (d_model, d_ff)),
            "b1": jnp.zeros((d_ff,), jnp.float32),
            "w2": n(ks[11], (d_ff, d_model)),
            "b2": jnp.zeros((d_model,), jnp.float32),
            "g2": jnp.ones((d_model,), jnp.float32),
            "be2": jnp.zeros((d_model,), jnp.float32),
        }

    layers = [one_layer(k) for k in jax.random.split(key, n_layers)]
    stacked = {name: jnp.stack([lp[name] for lp in layers], axis=0)
               for name in layers[0]}
    stacked["gf"] = jnp.ones((d_model,), jnp.float32)
    stacked["bf"] = jnp.zeros((d_model,), jnp.float32)
    return stacked


def encoder_reference(x, attn_mask, params, *, head, d_k, d_v):
    # Pure-JAX reference with standard MHA semantics (correctness oracle).
    mask_bias = attn_mask.astype(jnp.float32) * jnp.float32(-1e9)
    L = params["wq"].shape[0]
    scale = 1.0 / math.sqrt(d_k)
    B, S, _ = x.shape
    for l in range(L):
        q = x @ params["wq"][l] + params["bq"][l]
        k = x @ params["wk"][l] + params["bk"][l]
        v = x @ params["wv"][l] + params["bv"][l]
        qh = q.reshape(B, S, head, d_k)
        kh = k.reshape(B, S, head, d_k)
        vh = v.reshape(B, S, head, d_v)
        scores = jnp.einsum('bqhd,bkhd->bhqk', qh, kh) * scale
        scores = scores + mask_bias[:, None, :, :]
        attn = jax.nn.softmax(scores, axis=-1)
        ctx = jnp.einsum('bhqk,bkhd->bqhd', attn, vh).reshape(B, S, head * d_v)
        attn_out = ctx @ params["wo"][l] + params["bo"][l]
        y = _layernorm(attn_out + x, params["g1"][l], params["be1"][l])
        h1 = jax.nn.relu(y @ params["w1"][l] + params["b1"][l])
        h2 = h1 @ params["w2"][l] + params["b2"][l]
        x = _layernorm(h2 + y, params["g2"][l], params["be2"][l])
    return _layernorm(x, params["gf"], params["bf"])


if __name__ == "__main__":
    # Encoder hyperparameters (small, consistent with the module __init__ signature).
    head, d_model, d_k, d_v, d_ff, n_layers = 4, 32, 8, 8, 64, 2
    B, S = 2, 8

    root = jax.random.PRNGKey(0)
    k_x, k_p = jax.random.split(root)

    params = init_encoder_params(k_p, d_model, head, d_k, d_v, d_ff, n_layers)
    packed = pack_encoder_params(params, head=head, d_k=d_k, d_v=d_v)

    enc_input = jax.random.normal(k_x, (B, S, d_model), jnp.float32)
    # attn_mask: 1.0 = masked. Mask the last 2 key positions of batch element 1.
    attn_mask = jnp.zeros((B, S, S), jnp.float32)
    attn_mask = attn_mask.at[1, :, S - 2:].set(1.0)

    fwd = jax.jit(functools.partial(encoder_forward, head=head, d_k=d_k, d_v=d_v))
    out = jax.block_until_ready(fwd(enc_input, attn_mask, packed))

    ref = encoder_reference(enc_input, attn_mask, params,
                            head=head, d_k=d_k, d_v=d_v)
    assert out.shape == (B, S, d_model)
    assert bool(jnp.all(jnp.isfinite(out)))
    max_err = float(jnp.max(jnp.abs(out - ref)))
    assert max_err < 2e-2, f"max abs error vs reference too large: {max_err}"
    print("KERNEL_OK")
</pallas_src>

<mosaic_0001>
module attributes {stable_mosaic.version = 11 : i64} {
  func.func @encoder_kernel(%arg0: i32, %arg1: i32, %arg2: memref<16x32xf32, #tpu.memory_space<vmem>>, %arg3: memref<2x8x8xf32, #tpu.memory_space<vmem>>, %arg4: memref<1x32x96xf32, #tpu.memory_space<vmem>>, %arg5: memref<1x1x96xf32, #tpu.memory_space<vmem>>, %arg6: memref<1x32x32xf32, #tpu.memory_space<vmem>>, %arg7: memref<1x1x32xf32, #tpu.memory_space<vmem>>, %arg8: memref<1x1x32xf32, #tpu.memory_space<vmem>>, %arg9: memref<1x1x32xf32, #tpu.memory_space<vmem>>, %arg10: memref<1x32x64xf32, #tpu.memory_space<vmem>>, %arg11: memref<1x1x64xf32, #tpu.memory_space<vmem>>, %arg12: memref<1x64x32xf32, #tpu.memory_space<vmem>>, %arg13: memref<1x1x32xf32, #tpu.memory_space<vmem>>, %arg14: memref<1x1x32xf32, #tpu.memory_space<vmem>>, %arg15: memref<1x1x32xf32, #tpu.memory_space<vmem>>, %arg16: memref<1x32xf32, #tpu.memory_space<vmem>>, %arg17: memref<1x32xf32, #tpu.memory_space<vmem>>, %arg18: memref<16x32xf32, #tpu.memory_space<vmem>>, %arg19: memref<16x32xf32, #tpu.memory_space<vmem>>) attributes {dimension_semantics = [#tpu.dimension_semantics<parallel>, #tpu.dimension_semantics<arbitrary>], iteration_bounds = array<i64: 1, 2>, scalar_prefetch = 0 : i64, scratch_operands = 1 : i64, tpu.core_type = #tpu.core_type<tc>, window_params = [{transform_indices = @transform_0, window_bounds = array<i64: 16, 32>}, {transform_indices = @transform_1, window_bounds = array<i64: 2, 8, 8>}, {transform_indices = @transform_2, window_bounds = array<i64: 1, 32, 96>}, {transform_indices = @transform_3, window_bounds = array<i64: 1, 1, 96>}, {transform_indices = @transform_4, window_bounds = array<i64: 1, 32, 32>}, {transform_indices = @transform_5, window_bounds = array<i64: 1, 1, 32>}, {transform_indices = @transform_6, window_bounds = array<i64: 1, 1, 32>}, {transform_indices = @transform_7, window_bounds = array<i64: 1, 1, 32>}, {transform_indices = @transform_8, window_bounds = array<i64: 1, 32, 64>}, {transform_indices = @transform_9, window_bounds = array<i64: 1, 1, 64>}, {transform_indices = @transform_10, window_bounds = array<i64: 1, 64, 32>}, {transform_indices = @transform_11, window_bounds = array<i64: 1, 1, 32>}, {transform_indices = @transform_12, window_bounds = array<i64: 1, 1, 32>}, {transform_indices = @transform_13, window_bounds = array<i64: 1, 1, 32>}, {pipeline_mode = #tpu.pipeline_mode<synchronous>, transform_indices = @transform_14, window_bounds = array<i64: 1, 32>}, {pipeline_mode = #tpu.pipeline_mode<synchronous>, transform_indices = @transform_15, window_bounds = array<i64: 1, 32>}, {transform_indices = @transform_16, window_bounds = array<i64: 16, 32>}]} {
    %c0_i32 = arith.constant 0 : i32
    %0 = arith.cmpi eq, %arg1, %c0_i32 : i32
    %1 = arith.extui %0 : i1 to i32
    %c0_i32_0 = arith.constant 0 : i32
    %2 = arith.cmpi ne, %1, %c0_i32_0 : i32
    scf.if %2 {
      %c0_62 = arith.constant 0 : index
      %c0_63 = arith.constant 0 : index
      %125 = vector.load %arg2[%c0_62, %c0_63] : memref<16x32xf32, #tpu.memory_space<vmem>>, vector<16x32xf32>
      %c0_64 = arith.constant 0 : index
      %c0_65 = arith.constant 0 : index
      %126 = vector.load %arg19[%c0_64, %c0_65] : memref<16x32xf32, #tpu.memory_space<vmem>>, vector<16x32xf32>
      tpu.vector_store %arg19[%c0_64, %c0_65], %125 {strides = array<i32>} : memref<16x32xf32, #tpu.memory_space<vmem>>, vector<16x32xf32>,
    } else {
    }
    %c0 = arith.constant 0 : index
    %c0_1 = arith.constant 0 : index
    %3 = vector.load %arg19[%c0, %c0_1] : memref<16x32xf32, #tpu.memory_space<vmem>>, vector<16x32xf32>
    %c0_2 = arith.constant 0 : index
    %c0_3 = arith.constant 0 : index
    %c0_4 = arith.constant 0 : index
    %4 = vector.load %arg4[%c0_2, %c0_3, %c0_4] : memref<1x32x96xf32, #tpu.memory_space<vmem>>, vector<1x32x96xf32>
    %5 = vector.shape_cast %4 : vector<1x32x96xf32> to vector<32x96xf32>
    %cst = arith.constant dense<0.000000e+00> : vector<16x96xf32>
    %6 = tpu.matmul %3, %5, %cst {dimension_numbers = #tpu.dot_dimension_numbers<[1], [0], [0], [1], [0, 0, 1, 1], [], []>} : vector<16x32xf32>, vector<32x96xf32>, vector<16x96xf32> -> vector<16x96xf32>
    %c0_5 = arith.constant 0 : index
    %c0_6 = arith.constant 0 : index
    %c0_7 = arith.constant 0 : index
    %7 = vector.load %arg5[%c0_5, %c0_6, %c0_7] : memref<1x1x96xf32, #tpu.memory_space<vmem>>, vector<1x1x96xf32>
    %8 = vector.shape_cast %7 : vector<1x1x96xf32> to vector<1x96xf32>
    %9 = vector.broadcast %8 : vector<1x96xf32> to vector<16x96xf32>
    %10 = arith.addf %6, %9 : vector<16x96xf32>
    %11 = vector.extract_strided_slice %10 {offsets = [0, 0], sizes = [16, 24], strides = [1, 1]} : vector<16x96xf32> to vector<16x24xf32>
    %12 = vector.shape_cast %11 : vector<16x24xf32> to vector<2x8x24xf32>
    %13 = vector.extract_strided_slice %10 {offsets = [0, 24], sizes = [16, 24], strides = [1, 1]} : vector<16x96xf32> to vector<16x24xf32>
    %14 = vector.shape_cast %13 : vector<16x24xf32> to vector<2x8x24xf32>
    %15 = vector.extract_strided_slice %10 {offsets = [0, 48], sizes = [16, 24], strides = [1, 1]} : vector<16x96xf32> to vector<16x24xf32>
    %16 = vector.shape_cast %15 : vector<16x24xf32> to vector<2x8x24xf32>
    %17 = vector.extract_strided_slice %10 {offsets = [0, 72], sizes = [16, 24], strides = [1, 1]} : vector<16x96xf32> to vector<16x24xf32>
    %18 = vector.shape_cast %17 : vector<16x24xf32> to vector<2x8x24xf32>
    %19 = tpu.concatenate %12, %14, %16, %18 in 0 : vector<2x8x24xf32>, vector<2x8x24xf32>, vector<2x8x24xf32>, vector<2x8x24xf32> -> vector<8x8x24xf32>
    %20 = vector.extract_strided_slice %19 {offsets = [0, 0, 0], sizes = [8, 8, 8], strides = [1, 1, 1]} : vector<8x8x24xf32> to vector<8x8x8xf32>
    %21 = vector.extract_strided_slice %19 {offsets = [0, 0, 8], sizes = [8, 8, 8], strides = [1, 1, 1]} : vector<8x8x24xf32> to vector<8x8x8xf32>
    %22 = vector.extract_strided_slice %19 {offsets = [0, 0, 16], sizes = [8, 8, 8], strides = [1, 1, 1]} : vector<8x8x24xf32> to vector<8x8x8xf32>
    "tpu.trace_start"() <{level = 10 : i32, message = "bqd,bkd->bqk"}> : () -> ()
    %cst_8 = arith.constant dense<0.000000e+00> : vector<8x8x8xf32>
    %23 = tpu.matmul %20, %21, %cst_8 {dimension_numbers = #tpu.dot_dimension_numbers<[2], [2], [1], [1], [0, 0, 0, 1, 1, 1], [0], [0]>} : vector<8x8x8xf32>, vector<8x8x8xf32>, vector<8x8x8xf32> -> vector<8x8x8xf32>
    "tpu.trace_stop"() : () -> ()
    %c0_9 = arith.constant 0 : index
    %c0_10 = arith.constant 0 : index
    %c0_11 = arith.constant 0 : index
    %24 = vector.load %arg3[%c0_9, %c0_10, %c0_11] : memref<2x8x8xf32, #tpu.memory_space<vmem>>, vector<2x8x8xf32>
    %25 = tpu.concatenate %24, %24, %24, %24 in 0 : vector<2x8x8xf32>, vector<2x8x8xf32>, vector<2x8x8xf32>, vector<2x8x8xf32> -> vector<8x8x8xf32>
    %26 = arith.addf %23, %25 : vector<8x8x8xf32>
    %cst_12 = arith.constant dense<0xFF800000> : vector<8x8xf32>
    %27 = vector.multi_reduction <maximumf>, %26, %cst_12 [2] : vector<8x8x8xf32> to vector<8x8xf32>
    %28 = vector.shape_cast %27 : vector<8x8xf32> to vector<8x8x1xf32>
    %29 = vector.broadcast %28 : vector<8x8x1xf32> to vector<8x8x8xf32>
    %30 = arith.subf %26, %29 : vector<8x8x8xf32>
    %31 = math.exp %30 : vector<8x8x8xf32>
    %cst_13 = arith.constant dense<0.000000e+00> : vector<8x8xf32>
    %32 = vector.multi_reduction <add>, %31, %cst_13 [2] : vector<8x8x8xf32> to vector<8x8xf32>
    %33 = vector.shape_cast %32 : vector<8x8xf32> to vector<8x8x1xf32>
    %34 = tpu.reciprocal %33 {approx = true} : vector<8x8x1xf32> -> vector<8x8x1xf32>
    %35 = vector.broadcast %34 : vector<8x8x1xf32> to vector<8x8x8xf32>
    %36 = arith.mulf %31, %35 : vector<8x8x8xf32>
    "tpu.trace_start"() <{level = 10 : i32, message = "bqk,bkd->bqd"}> : () -> ()
    %cst_14 = arith.constant dense<0.000000e+00> : vector<8x8x8xf32>
    %37 = tpu.matmul %36, %22, %cst_14 {dimension_numbers = #tpu.dot_dimension_numbers<[2], [1], [1], [2], [0, 0, 0, 1, 1, 2], [0], [0]>} : vector<8x8x8xf32>, vector<8x8x8xf32>, vector<8x8x8xf32> -> vector<8x8x8xf32>
    "tpu.trace_stop"() : () -> ()
    %38 = vector.extract_strided_slice %37 {offsets = [0, 0, 0], sizes = [2, 8, 8], strides = [1, 1, 1]} : vector<8x8x8xf32> to vector<2x8x8xf32>
    %39 = vector.extract_strided_slice %37 {offsets = [2, 0, 0], sizes = [2, 8, 8], strides = [1, 1, 1]} : vector<8x8x8xf32> to vector<2x8x8xf32>
    %40 = vector.extract_strided_slice %37 {offsets = [4, 0, 0], sizes = [2, 8, 8], strides = [1, 1, 1]} : vector<8x8x8xf32> to vector<2x8x8xf32>
    %41 = vector.extract_strided_slice %37 {offsets = [6, 0, 0], sizes = [2, 8, 8], strides = [1, 1, 1]} : vector<8x8x8xf32> to vector<2x8x8xf32>
    %42 = tpu.concatenate %38, %39, %40, %41 in 2 : vector<2x8x8xf32>, vector<2x8x8xf32>, vector<2x8x8xf32>, vector<2x8x8xf32> -> vector<2x8x32xf32>
    %43 = vector.shape_cast %42 : vector<2x8x32xf32> to vector<16x32xf32>
    %c0_15 = arith.constant 0 : index
    %c0_16 = arith.constant 0 : index
    %c0_17 = arith.constant 0 : index
    %44 = vector.load %arg6[%c0_15, %c0_16, %c0_17] : memref<1x32x32xf32, #tpu.memory_space<vmem>>, vector<1x32x32xf32>
    %45 = vector.shape_cast %44 : vector<1x32x32xf32> to vector<32x32xf32>
    %cst_18 = arith.constant dense<0.000000e+00> : vector<16x32xf32>
    %46 = tpu.matmul %43, %45, %cst_18 {dimension_numbers = #tpu.dot_dimension_numbers<[1], [0], [0], [1], [0, 0, 1, 1], [], []>} : vector<16x32xf32>, vector<32x32xf32>, vector<16x32xf32> -> vector<16x32xf32>
    %c0_19 = arith.constant 0 : index
    %c0_20 = arith.constant 0 : index
    %c0_21 = arith.constant 0 : index
    %47 = vector.load %arg7[%c0_19, %c0_20, %c0_21] : memref<1x1x32xf32, #tpu.memory_space<vmem>>, vector<1x1x32xf32>
    %48 = vector.shape_cast %47 : vector<1x1x32xf32> to vector<1x32xf32>
    %49 = vector.broadcast %48 : vector<1x32xf32> to vector<16x32xf32>
    %50 = arith.addf %46, %49 : vector<16x32xf32>
    %51 = arith.addf %50, %3 : vector<16x32xf32>
    %c0_22 = arith.constant 0 : index
    %c0_23 = arith.constant 0 : index
    %c0_24 = arith.constant 0 : index
    %52 = vector.load %arg8[%c0_22, %c0_23, %c0_24] : memref<1x1x32xf32, #tpu.memory_space<vmem>>, vector<1x1x32xf32>
    %53 = vector.shape_cast %52 : vector<1x1x32xf32> to vector<1x32xf32>
    %c0_25 = arith.constant 0 : index
    %c0_26 = arith.constant 0 : index
    %c0_27 = arith.constant 0 : index
    %54 = vector.load %arg9[%c0_25, %c0_26, %c0_27] : memref<1x1x32xf32, #tpu.memory_space<vmem>>, vector<1x1x32xf32>
    %55 = vector.shape_cast %54 : vector<1x1x32xf32> to vector<1x32xf32>
    %cst_28 = arith.constant dense<0.000000e+00> : vector<16xf32>
    %56 = vector.multi_reduction <add>, %51, %cst_28 [1] : vector<16x32xf32> to vector<16xf32>
    %57 = vector.shape_cast %56 : vector<16xf32> to vector<16x1xf32>
    %cst_29 = arith.constant 3.200000e+01 : f32
    %58 = vector.broadcast %cst_29 : f32 to vector<16x1xf32>
    %59 = arith.divf %57, %58 : vector<16x1xf32>
    %60 = vector.broadcast %59 : vector<16x1xf32> to vector<16x32xf32>
    %61 = arith.subf %51, %60 : vector<16x32xf32>
    %62 = arith.mulf %61, %61 : vector<16x32xf32>
    %cst_30 = arith.constant dense<0.000000e+00> : vector<16xf32>
    %63 = vector.multi_reduction <add>, %62, %cst_30 [1] : vector<16x32xf32> to vector<16xf32>
    %64 = vector.shape_cast %63 : vector<16xf32> to vector<16x1xf32>
    %cst_31 = arith.constant 3.200000e+01 : f32
    %65 = vector.broadcast %cst_31 : f32 to vector<16x1xf32>
    %66 = arith.divf %64, %65 : vector<16x1xf32>
    %67 = vector.broadcast %59 : vector<16x1xf32> to vector<16x32xf32>
    %68 = arith.subf %51, %67 : vector<16x32xf32>
    %cst_32 = arith.constant 9.99999974E-6 : f32
    %69 = vector.broadcast %cst_32 : f32 to vector<16x1xf32>
    %70 = arith.addf %66, %69 : vector<16x1xf32>
    %71 = math.rsqrt %70 : vector<16x1xf32>
    %72 = vector.broadcast %71 : vector<16x1xf32> to vector<16x32xf32>
    %73 = arith.mulf %68, %72 : vector<16x32xf32>
    %74 = vector.broadcast %53 : vector<1x32xf32> to vector<16x32xf32>
    %75 = arith.mulf %73, %74 : vector<16x32xf32>
    %76 = vector.broadcast %55 : vector<1x32xf32> to vector<16x32xf32>
    %77 = arith.addf %75, %76 : vector<16x32xf32>
    %c0_33 = arith.constant 0 : index
    %c0_34 = arith.constant 0 : index
    %c0_35 = arith.constant 0 : index
    %78 = vector.load %arg10[%c0_33, %c0_34, %c0_35] : memref<1x32x64xf32, #tpu.memory_space<vmem>>, vector<1x32x64xf32>
    %79 = vector.shape_cast %78 : vector<1x32x64xf32> to vector<32x64xf32>
    %cst_36 = arith.constant dense<0.000000e+00> : vector<16x64xf32>
    %80 = tpu.matmul %77, %79, %cst_36 {dimension_numbers = #tpu.dot_dimension_numbers<[1], [0], [0], [1], [0, 0, 1, 1], [], []>} : vector<16x32xf32>, vector<32x64xf32>, vector<16x64xf32> -> vector<16x64xf32>
    %c0_37 = arith.constant 0 : index
    %c0_38 = arith.constant 0 : index
    %c0_39 = arith.constant 0 : index
    %81 = vector.load %arg11[%c0_37, %c0_38, %c0_39] : memref<1x1x64xf32, #tpu.memory_space<vmem>>, vector<1x1x64xf32>
    %82 = vector.shape_cast %81 : vector<1x1x64xf32> to vector<1x64xf32>
    %83 = vector.broadcast %82 : vector<1x64xf32> to vector<16x64xf32>
    %84 = arith.addf %80, %83 : vector<16x64xf32>
    %cst_40 = arith.constant 0.000000e+00 : f32
    %85 = vector.broadcast %cst_40 : f32 to vector<16x64xf32>
    %86 = arith.maximumf %84, %85 : vector<16x64xf32>
    %c0_41 = arith.constant 0 : index
    %c0_42 = arith.constant 0 : index
    %c0_43 = arith.constant 0 : index
    %87 = vector.load %arg12[%c0_41, %c0_42, %c0_43] : memref<1x64x32xf32, #tpu.memory_space<vmem>>, vector<1x64x32xf32>
    %88 = vector.shape_cast %87 : vector<1x64x32xf32> to vector<64x32xf32>
    %cst_44 = arith.constant dense<0.000000e+00> : vector<16x32xf32>
    %89 = tpu.matmul %86, %88, %cst_44 {dimension_numbers = #tpu.dot_dimension_numbers<[1], [0], [0], [1], [0, 0, 1, 1], [], []>} : vector<16x64xf32>, vector<64x32xf32>, vector<16x32xf32> -> vector<16x32xf32>
    %c0_45 = arith.constant 0 : index
    %c0_46 = arith.constant 0 : index
    %c0_47 = arith.constant 0 : index
    %90 = vector.load %arg13[%c0_45, %c0_46, %c0_47] : memref<1x1x32xf32, #tpu.memory_space<vmem>>, vector<1x1x32xf32>
    %91 = vector.shape_cast %90 : vector<1x1x32xf32> to vector<1x32xf32>
    %92 = vector.broadcast %91 : vector<1x32xf32> to vector<16x32xf32>
    %93 = arith.addf %89, %92 : vector<16x32xf32>
    %94 = arith.addf %93, %77 : vector<16x32xf32>
    %c0_48 = arith.constant 0 : index
    %c0_49 = arith.constant 0 : index
    %c0_50 = arith.constant 0 : index
    %95 = vector.load %arg14[%c0_48, %c0_49, %c0_50] : memref<1x1x32xf32, #tpu.memory_space<vmem>>, vector<1x1x32xf32>
    %96 = vector.shape_cast %95 : vector<1x1x32xf32> to vector<1x32xf32>
    %c0_51 = arith.constant 0 : index
    %c0_52 = arith.constant 0 : index
    %c0_53 = arith.constant 0 : index
    %97 = vector.load %arg15[%c0_51, %c0_52, %c0_53] : memref<1x1x32xf32, #tpu.memory_space<vmem>>, vector<1x1x32xf32>
    %98 = vector.shape_cast %97 : vector<1x1x32xf32> to vector<1x32xf32>
    %cst_54 = arith.constant dense<0.000000e+00> : vector<16xf32>
    %99 = vector.multi_reduction <add>, %94, %cst_54 [1] : vector<16x32xf32> to vector<16xf32>
    %100 = vector.shape_cast %99 : vector<16xf32> to vector<16x1xf32>
    %cst_55 = arith.constant 3.200000e+01 : f32
    %101 = vector.broadcast %cst_55 : f32 to vector<16x1xf32>
    %102 = arith.divf %100, %101 : vector<16x1xf32>
    %103 = vector.broadcast %102 : vector<16x1xf32> to vector<16x32xf32>
    %104 = arith.subf %94, %103 : vector<16x32xf32>
    %105 = arith.mulf %104, %104 : vector<16x32xf32>
    %cst_56 = arith.constant dense<0.000000e+00> : vector<16xf32>
    %106 = vector.multi_reduction <add>, %105, %cst_56 [1] : vector<16x32xf32> to vector<16xf32>
    %107 = vector.shape_cast %106 : vector<16xf32> to vector<16x1xf32>
    %cst_57 = arith.constant 3.200000e+01 : f32
    %108 = vector.broadcast %cst_57 : f32 to vector<16x1xf32>
    %109 = arith.divf %107, %108 : vector<16x1xf32>
    %110 = vector.broadcast %102 : vector<16x1xf32> to vector<16x32xf32>
    %111 = arith.subf %94, %110 : vector<16x32xf32>
    %cst_58 = arith.constant 9.99999974E-6 : f32
    %112 = vector.broadcast %cst_58 : f32 to vector<16x1xf32>
    %113 = arith.addf %109, %112 : vector<16x1xf32>
    %114 = math.rsqrt %113 : vector<16x1xf32>
    %115 = vector.broadcast %114 : vector<16x1xf32> to vector<16x32xf32>
    %116 = arith.mulf %111, %115 : vector<16x32xf32>
    %117 = vector.broadcast %96 : vector<1x32xf32> to vector<16x32xf32>
    %118 = arith.mulf %116, %117 : vector<16x32xf32>
    %119 = vector.broadcast %98 : vector<1x32xf32> to vector<16x32xf32>
    %120 = arith.addf %118, %119 : vector<16x32xf32>
    %c0_59 = arith.constant 0 : index
    %c0_60 = arith.constant 0 : index
    %121 = vector.load %arg19[%c0_59, %c0_60] : memref<16x32xf32, #tpu.memory_space<vmem>>, vector<16x32xf32>
    tpu.vector_store %arg19[%c0_59, %c0_60], %120 {strides = array<i32>} : memref<16x32xf32, #tpu.memory_space<vmem>>, vector<16x32xf32>,
    %c1_i32 = arith.constant 1 : i32
    %122 = arith.cmpi eq, %arg1, %c1_i32 : i32
    %123 = arith.extui %122 : i1 to i32
    %c0_i32_61 = arith.constant 0 : i32
    %124 = arith.cmpi ne, %123, %c0_i32_61 : i32
    scf.if %124 {
      %c0_62 = arith.constant 0 : index
      %c0_63 = arith.constant 0 : index
      %125 = vector.load %arg16[%c0_62, %c0_63] : memref<1x32xf32, #tpu.memory_space<vmem>>, vector<1x32xf32>
      %c0_64 = arith.constant 0 : index
      %c0_65 = arith.constant 0 : index
      %126 = vector.load %arg17[%c0_64, %c0_65] : memref<1x32xf32, #tpu.memory_space<vmem>>, vector<1x32xf32>
      %cst_66 = arith.constant dense<0.000000e+00> : vector<16xf32>
      %127 = vector.multi_reduction <add>, %120, %cst_66 [1] : vector<16x32xf32> to vector<16xf32>
      %128 = vector.shape_cast %127 : vector<16xf32> to vector<16x1xf32>
      %cst_67 = arith.constant 3.200000e+01 : f32
      %129 = vector.broadcast %cst_67 : f32 to vector<16x1xf32>
      %130 = arith.divf %128, %129 : vector<16x1xf32>
      %131 = vector.broadcast %130 : vector<16x1xf32> to vector<16x32xf32>
      %132 = arith.subf %120, %131 : vector<16x32xf32>
      %133 = arith.mulf %132, %132 : vector<16x32xf32>
      %cst_68 = arith.constant dense<0.000000e+00> : vector<16xf32>
      %134 = vector.multi_reduction <add>, %133, %cst_68 [1] : vector<16x32xf32> to vector<16xf32>
      %135 = vector.shape_cast %134 : vector<16xf32> to vector<16x1xf32>
      %cst_69 = arith.constant 3.200000e+01 : f32
      %136 = vector.broadcast %cst_69 : f32 to vector<16x1xf32>
      %137 = arith.divf %135, %136 : vector<16x1xf32>
      %138 = vector.broadcast %130 : vector<16x1xf32> to vector<16x32xf32>
      %139 = arith.subf %120, %138 : vector<16x32xf32>
      %cst_70 = arith.constant 9.99999974E-6 : f32
      %140 = vector.broadcast %cst_70 : f32 to vector<16x1xf32>
      %141 = arith.addf %137, %140 : vector<16x1xf32>
      %142 = math.rsqrt %141 : vector<16x1xf32>
      %143 = vector.broadcast %142 : vector<16x1xf32> to vector<16x32xf32>
      %144 = arith.mulf %139, %143 : vector<16x32xf32>
      %145 = vector.broadcast %125 : vector<1x32xf32> to vector<16x32xf32>
      %146 = arith.mulf %144, %145 : vector<16x32xf32>
      %147 = vector.broadcast %126 : vector<1x32xf32> to vector<16x32xf32>
      %148 = arith.addf %146, %147 : vector<16x32xf32>
      %c0_71 = arith.constant 0 : index
      %c0_72 = arith.constant 0 : index
      %149 = vector.load %arg18[%c0_71, %c0_72] : memref<16x32xf32, #tpu.memory_space<vmem>>, vector<16x32xf32>
      tpu.vector_store %arg18[%c0_71, %c0_72], %148 {strides = array<i32>} : memref<16x32xf32, #tpu.memory_space<vmem>>, vector<16x32xf32>,
    } else {
    }
    return
  }
  func.func @transform_0(%arg0: i32, %arg1: i32) -> (i32, i32) {
    %c0_i32 = arith.constant 0 : i32
    %c0_i32_0 = arith.constant 0 : i32
    return %arg0, %c0_i32 : i32, i32
  }
  func.func @transform_1(%arg0: i32, %arg1: i32) -> (i32, i32, i32) {
    %c0_i32 = arith.constant 0 : i32
    %c0_i32_0 = arith.constant 0 : i32
    %c0_i32_1 = arith.constant 0 : i32
    return %arg0, %c0_i32, %c0_i32_0 : i32, i32, i32
  }
  func.func @transform_2(%arg0: i32, %arg1: i32) -> (i32, i32, i32) {
    %c0_i32 = arith.constant 0 : i32
    %c0_i32_0 = arith.constant 0 : i32
    %c0_i32_1 = arith.constant 0 : i32
    return %arg1, %c0_i32, %c0_i32_0 : i32, i32, i32
  }
  func.func @transform_3(%arg0: i32, %arg1: i32) -> (i32, i32, i32) {
    %c0_i32 = arith.constant 0 : i32
    %c0_i32_0 = arith.constant 0 : i32
    %c0_i32_1 = arith.constant 0 : i32
    return %arg1, %c0_i32, %c0_i32_0 : i32, i32, i32
  }
  func.func @transform_4(%arg0: i32, %arg1: i32) -> (i32, i32, i32) {
    %c0_i32 = arith.constant 0 : i32
    %c0_i32_0 = arith.constant 0 : i32
    %c0_i32_1 = arith.constant 0 : i32
    return %arg1, %c0_i32, %c0_i32_0 : i32, i32, i32
  }
  func.func @transform_5(%arg0: i32, %arg1: i32) -> (i32, i32, i32) {
    %c0_i32 = arith.constant 0 : i32
    %c0_i32_0 = arith.constant 0 : i32
    %c0_i32_1 = arith.constant 0 : i32
    return %arg1, %c0_i32, %c0_i32_0 : i32, i32, i32
  }
  func.func @transform_6(%arg0: i32, %arg1: i32) -> (i32, i32, i32) {
    %c0_i32 = arith.constant 0 : i32
    %c0_i32_0 = arith.constant 0 : i32
    %c0_i32_1 = arith.constant 0 : i32
    return %arg1, %c0_i32, %c0_i32_0 : i32, i32, i32
  }
  func.func @transform_7(%arg0: i32, %arg1: i32) -> (i32, i32, i32) {
    %c0_i32 = arith.constant 0 : i32
    %c0_i32_0 = arith.constant 0 : i32
    %c0_i32_1 = arith.constant 0 : i32
    return %arg1, %c0_i32, %c0_i32_0 : i32, i32, i32
  }
  func.func @transform_8(%arg0: i32, %arg1: i32) -> (i32, i32, i32) {
    %c0_i32 = arith.constant 0 : i32
    %c0_i32_0 = arith.constant 0 : i32
    %c0_i32_1 = arith.constant 0 : i32
    return %arg1, %c0_i32, %c0_i32_0 : i32, i32, i32
  }
  func.func @transform_9(%arg0: i32, %arg1: i32) -> (i32, i32, i32) {
    %c0_i32 = arith.constant 0 : i32
    %c0_i32_0 = arith.constant 0 : i32
    %c0_i32_1 = arith.constant 0 : i32
    return %arg1, %c0_i32, %c0_i32_0 : i32, i32, i32
  }
  func.func @transform_10(%arg0: i32, %arg1: i32) -> (i32, i32, i32) {
    %c0_i32 = arith.constant 0 : i32
    %c0_i32_0 = arith.constant 0 : i32
    %c0_i32_1 = arith.constant 0 : i32
    return %arg1, %c0_i32, %c0_i32_0 : i32, i32, i32
  }
  func.func @transform_11(%arg0: i32, %arg1: i32) -> (i32, i32, i32) {
    %c0_i32 = arith.constant 0 : i32
    %c0_i32_0 = arith.constant 0 : i32
    %c0_i32_1 = arith.constant 0 : i32
    return %arg1, %c0_i32, %c0_i32_0 : i32, i32, i32
  }
  func.func @transform_12(%arg0: i32, %arg1: i32) -> (i32, i32, i32) {
    %c0_i32 = arith.constant 0 : i32
    %c0_i32_0 = arith.constant 0 : i32
    %c0_i32_1 = arith.constant 0 : i32
    return %arg1, %c0_i32, %c0_i32_0 : i32, i32, i32
  }
  func.func @transform_13(%arg0: i32, %arg1: i32) -> (i32, i32, i32) {
    %c0_i32 = arith.constant 0 : i32
    %c0_i32_0 = arith.constant 0 : i32
    %c0_i32_1 = arith.constant 0 : i32
    return %arg1, %c0_i32, %c0_i32_0 : i32, i32, i32
  }
  func.func @transform_14(%arg0: i32, %arg1: i32) -> (i32, i32) {
    %c0_i32 = arith.constant 0 : i32
    %c0_i32_0 = arith.constant 0 : i32
    %c0_i32_1 = arith.constant 0 : i32
    return %c0_i32, %c0_i32_0 : i32, i32
  }
  func.func @transform_15(%arg0: i32, %arg1: i32) -> (i32, i32) {
    %c0_i32 = arith.constant 0 : i32
    %c0_i32_0 = arith.constant 0 : i32
    %c0_i32_1 = arith.constant 0 : i32
    return %c0_i32, %c0_i32_0 : i32, i32
  }
  func.func @transform_16(%arg0: i32, %arg1: i32) -> (i32, i32) {
    %c0_i32 = arith.constant 0 : i32
    %c0_i32_0 = arith.constant 0 : i32
    return %arg0, %c0_i32 : i32, i32
  }
}

</mosaic_0001>

<llo_original>
// kernel: encoder_forward.1
$region0: #{encoder_forward.1}
  #allocation0 [shape = 'u32[]', space=smem, size = 0x4, offset = 0x4, fixed_abs, tag = 'smem constant byte address 0x4 - core index']
  #allocation1 [shape = 'u32[72,128]{1,0:T(1,128)}', space=vmem, size = 0x9000, scoped, tag = 'internal scratch']
  #allocation2 [shape = 'f32[16,32]{1,0:T(8,128)}', space=vmem, size = 0x2000, scoped, tag = 'scratch operand']
  %s0 = inlined_call_operand.vmem [shape: f32[16,32], index: 0, kind: input, shape index: {}]
  %s1 = inlined_call_operand.vmem [shape: f32[2,8,8], index: 1, kind: input, shape index: {}]
  %s2 = inlined_call_operand.vmem [shape: f32[2,32,96], index: 2, kind: input, shape index: {}]
  %s3 = inlined_call_operand.vmem [shape: f32[2,1,96], index: 3, kind: input, shape index: {}]
  %s4 = inlined_call_operand.vmem [shape: f32[2,32,32], index: 4, kind: input, shape index: {}]
  %s5 = inlined_call_operand.vmem [shape: f32[2,1,32], index: 5, kind: input, shape index: {}]
  %s6 = inlined_call_operand.vmem [shape: f32[2,1,32], index: 6, kind: input, shape index: {}]
  %s7 = inlined_call_operand.vmem [shape: f32[2,1,32], index: 7, kind: input, shape index: {}]
  %s8 = inlined_call_operand.vmem [shape: f32[2,32,64], index: 8, kind: input, shape index: {}]
  %s9 = inlined_call_operand.vmem [shape: f32[2,1,64], index: 9, kind: input, shape index: {}]
  %s10 = inlined_call_operand.vmem [shape: f32[2,64,32], index: 10, kind: input, shape index: {}]
  %s11 = inlined_call_operand.vmem [shape: f32[2,1,32], index: 11, kind: input, shape index: {}]
  %s12 = inlined_call_operand.vmem [shape: f32[2,1,32], index: 12, kind: input, shape index: {}]
  %s13 = inlined_call_operand.vmem [shape: f32[2,1,32], index: 13, kind: input, shape index: {}]
  %s14 = inlined_call_operand.vmem [shape: f32[1,32], index: 14, kind: input, shape index: {}]
  %s15 = inlined_call_operand.vmem [shape: f32[1,32], index: 15, kind: input, shape index: {}]
  %s16 = inlined_call_operand.hbm [shape: f32[16,32], index: 16, kind: output, shape index: {}]
  %s17 = sld [smem:[#allocation0]]
  $region105: #{encoder_forward.1} parent=0
    _
  %s19 = ssub.s32 1, %s17
  %s20 = scalar_select 0, %s19, %s17
  $region1: #{encoder_forward.1} parent=0
    #allocation3 [shape = 'u8[8192]{0}', space=vmem, size = 0x2000, scoped, tag = 'output window, operand 0, single buffered']
    #allocation4 [shape = 's32[2]{0}', space=sflag, size = 0x8, scoped, tag = 'scoped memory for encoder_forward.1']
    %21 = vsyncpa [#allocation4], 0
    loop: start=0, step=1, limit=4
    $region2: #{encoder_forward.1} parent=1 // loop_pre_header
      _
    $region3: #{encoder_forward.1} parent=1 // loop_header
      %s23 = sphi 0, %s27
      %p24 = scmp.ge.s32.totalorder %s23, 4
      %s30 = sphi 0, %s42
      %s31 = sphi 0, %s38
      %s32 = sphi 0, %s30
      %s33 = sphi 0, %s31
      %s34 = sphi 0, %s32
      %s35 = sphi 0, %s33
      %s45 = sphi 0, %s47
      %s48 = sphi 0, %s45
      %s49 = sphi 0, %s48
      %s65 = sphi 0, %s49
      %s71 = sphi 0, %s73
      %s74 = sphi 0, %s71
      %s75 = sphi 0, %s74
      %s91 = sphi 0, %s75
      %s97 = sphi 0, %s99
      %s100 = sphi 0, %s97
      %s101 = sphi 0, %s100
      %s117 = sphi 0, %s101
      %s123 = sphi 0, %s125
      %s126 = sphi 0, %s123
      %s127 = sphi 0, %s126
      %s143 = sphi 0, %s127
      %s149 = sphi 0, %s151
      %s152 = sphi 0, %s149
      %s153 = sphi 0, %s152
      %s169 = sphi 0, %s153
      %s175 = sphi 0, %s177
      %s178 = sphi 0, %s175
      %s179 = sphi 0, %s178
      %s195 = sphi 0, %s179
      %s201 = sphi 0, %s203
      %s204 = sphi 0, %s201
      %s205 = sphi 0, %s204
      %s221 = sphi 0, %s205
      %s227 = sphi 0, %s229
      %s230 = sphi 0, %s227
      %s231 = sphi 0, %s230
      %s247 = sphi 0, %s231
      %s253 = sphi 0, %s255
      %s256 = sphi 0, %s253
      %s257 = sphi 0, %s256
      %s273 = sphi 0, %s257
      %s279 = sphi 0, %s281
      %s282 = sphi 0, %s279
      %s283 = sphi 0, %s282
      %s299 = sphi 0, %s283
      %s305 = sphi 0, %s307
      %s308 = sphi 0, %s305
      %s309 = sphi 0, %s308
      %s325 = sphi 0, %s309
      %s331 = sphi 0, %s333
      %s334 = sphi 0, %s331
      %s335 = sphi 0, %s334
      %s351 = sphi 0, %s335
      %s357 = sphi 0, %s359
      %s360 = sphi 0, %s357
      %s361 = sphi 0, %s360
      %s377 = sphi 0, %s361
      %s383 = sphi 0, %s385
      %s386 = sphi 0, %s383
      %s387 = sphi 0, %s386
      %s403 = sphi 0, %s387
      %s407 = sphi 0, %s407
      %s409 = sphi 0, %s407
      %s410 = sphi 0, %s409
      %s424 = sphi 0, %s410
      %s428 = sphi 0, %s428
      %s430 = sphi 0, %s428
      %s431 = sphi 0, %s430
      %s445 = sphi 0, %s431
      %s451 = sphi 0, %s453
      %s454 = sphi 0, %s451
      %s455 = sphi 0, %s454
      %s471 = sphi 0, %s455
    $region4: #{encoder_forward.1} parent=1 // loop_header_branch
      %26 = sbr.rel (%p24) target = $region8
    $region5: #{encoder_forward.1} parent=1 // loop_body
      %s28 = ssub.s32 %s23, 1
      %s29 = ssub.s32 %s23, 2
      %s36 = sadd.s32 1, %s31
      %p37 = scmp.ge.s32.totalorder %s36, 2
      %s38 = scalar_select %p37, 0, %s36
      %s39 = sadd.s32 1, %s30
      %s40 = scalar_select %p37, %s39, %s30
      %p41 = scmp.ge.s32.totalorder %s40, 1
      %s42 = scalar_select %p41, 0, %s40
      %s43 = ssub.s32 %s30, %s42
      %p44 = scmp.eq.s32.totalorder %s43, 0
      %s46 = sadd.s32 %s45, 1
      %s47 = scalar_select %p44, %s45, %s46
      %p50 = pneg %p44
      %p51 = scmp.eq.s32.totalorder %s23, 1
      %p52 = por %p50, %p51
      %p53 = scmp.ne.s32.totalorder %s45, %s48
      %p54 = scmp.eq.s32.totalorder %s23, 0
      %p55 = por %p53, %p54
      %p56 = scmp.ne.s32.totalorder %s45, %s48
      %p57 = scmp.eq.s32.totalorder %s28, 1
      %p58 = por %p56, %p57
      %p59 = scmp.ne.s32.totalorder %s48, %s49
      %p60 = scmp.eq.s32.totalorder %s28, 0
      %p61 = por %p59, %p60
      %p62 = scmp.ne.s32.totalorder %s48, %s49
      %p63 = scmp.eq.s32.totalorder %s29, 1
      %p64 = por %p62, %p63
      %p66 = scmp.ne.s32.totalorder %s49, %s65
      %p67 = scmp.eq.s32.totalorder %s29, 0
      %p68 = por %p66, %p67
      %s69 = ssub.s32 %s30, %s42
      %p70 = scmp.eq.s32.totalorder %s69, 0
      %s72 = sadd.s32 %s71, 1
      %s73 = scalar_select %p70, %s71, %s72
      %p76 = pneg %p70
      %p77 = scmp.eq.s32.totalorder %s23, 1
      %p78 = por %p76, %p77
      %p79 = scmp.ne.s32.totalorder %s71, %s74
      %p80 = scmp.eq.s32.totalorder %s23, 0
      %p81 = por %p79, %p80
      %p82 = scmp.ne.s32.totalorder %s71, %s74
      %p83 = scmp.eq.s32.totalorder %s28, 1
      %p84 = por %p82, %p83
      %p85 = scmp.ne.s32.totalorder %s74, %s75
      %p86 = scmp.eq.s32.totalorder %s28, 0
      %p87 = por %p85, %p86
      %p88 = scmp.ne.s32.totalorder %s74, %s75
      %p89 = scmp.eq.s32.totalorder %s29, 1
      %p90 = por %p88, %p89
      %p92 = scmp.ne.s32.totalorder %s75, %s91
      %p93 = scmp.eq.s32.totalorder %s29, 0
      %p94 = por %p92, %p93
      %s95 = ssub.s32 %s31, %s38
      %p96 = scmp.eq.s32.totalorder %s95, 0
      %s98 = sadd.s32 %s97, 1
      %s99 = scalar_select %p96, %s97, %s98
      %p102 = pneg %p96
      %p103 = scmp.eq.s32.totalorder %s23, 1
      %p104 = por %p102, %p103
      %p105 = scmp.ne.s32.totalorder %s97, %s100
      %p106 = scmp.eq.s32.totalorder %s23, 0
      %p107 = por %p105, %p106
      %p108 = scmp.ne.s32.totalorder %s97, %s100
      %p109 = scmp.eq.s32.totalorder %s28, 1
      %p110 = por %p108, %p109
      %p111 = scmp.ne.s32.totalorder %s100, %s101
      %p112 = scmp.eq.s32.totalorder %s28, 0
      %p113 = por %p111, %p112
      %p114 = scmp.ne.s32.totalorder %s100, %s101
      %p115 = scmp.eq.s32.totalorder %s29, 1
      %p116 = por %p114, %p115
      %p118 = scmp.ne.s32.totalorder %s101, %s117
      %p119 = scmp.eq.s32.totalorder %s29, 0
      %p120 = por %p118, %p119
      %s121 = ssub.s32 %s31, %s38
      %p122 = scmp.eq.s32.totalorder %s121, 0
      %s124 = sadd.s32 %s123, 1
      %s125 = scalar_select %p122, %s123, %s124
      %p128 = pneg %p122
      %p129 = scmp.eq.s32.totalorder %s23, 1
      %p130 = por %p128, %p129
      %p131 = scmp.ne.s32.totalorder %s123, %s126
      %p132 = scmp.eq.s32.totalorder %s23, 0
      %p133 = por %p131, %p132
      %p134 = scmp.ne.s32.totalorder %s123, %s126
      %p135 = scmp.eq.s32.totalorder %s28, 1
      %p136 = por %p134, %p135
      %p137 = scmp.ne.s32.totalorder %s126, %s127
      %p138 = scmp.eq.s32.totalorder %s28, 0
      %p139 = por %p137, %p138
      %p140 = scmp.ne.s32.totalorder %s126, %s127
      %p141 = scmp.eq.s32.totalorder %s29, 1
      %p142 = por %p140, %p141
      %p144 = scmp.ne.s32.totalorder %s127, %s143
      %p145 = scmp.eq.s32.totalorder %s29, 0
      %p146 = por %p144, %p145
      %s147 = ssub.s32 %s31, %s38
      %p148 = scmp.eq.s32.totalorder %s147, 0
      %s150 = sadd.s32 %s149, 1
      %s151 = scalar_select %p148, %s149, %s150
      %p154 = pneg %p148
      %p155 = scmp.eq.s32.totalorder %s23, 1
      %p156 = por %p154, %p155
      %p157 = scmp.ne.s32.totalorder %s149, %s152
      %p158 = scmp.eq.s32.totalorder %s23, 0
      %p159 = por %p157, %p158
      %p160 = scmp.ne.s32.totalorder %s149, %s152
      %p161 = scmp.eq.s32.totalorder %s28, 1
      %p162 = por %p160, %p161
      %p163 = scmp.ne.s32.totalorder %s152, %s153
      %p164 = scmp.eq.s32.totalorder %s28, 0
      %p165 = por %p163, %p164
      %p166 = scmp.ne.s32.totalorder %s152, %s153
      %p167 = scmp.eq.s32.totalorder %s29, 1
      %p168 = por %p166, %p167
      %p170 = scmp.ne.s32.totalorder %s153, %s169
      %p171 = scmp.eq.s32.totalorder %s29, 0
      %p172 = por %p170, %p171
      %s173 = ssub.s32 %s31, %s38
      %p174 = scmp.eq.s32.totalorder %s173, 0
      %s176 = sadd.s32 %s175, 1
      %s177 = scalar_select %p174, %s175, %s176
      %p180 = pneg %p174
      %p181 = scmp.eq.s32.totalorder %s23, 1
      %p182 = por %p180, %p181
      %p183 = scmp.ne.s32.totalorder %s175, %s178
      %p184 = scmp.eq.s32.totalorder %s23, 0
      %p185 = por %p183, %p184
      %p186 = scmp.ne.s32.totalorder %s175, %s178
      %p187 = scmp.eq.s32.totalorder %s28, 1
      %p188 = por %p186, %p187
      %p189 = scmp.ne.s32.totalorder %s178, %s179
      %p190 = scmp.eq.s32.totalorder %s28, 0
      %p191 = por %p189, %p190
      %p192 = scmp.ne.s32.totalorder %s178, %s179
      %p193 = scmp.eq.s32.totalorder %s29, 1
      %p194 = por %p192, %p193
      %p196 = scmp.ne.s32.totalorder %s179, %s195
      %p197 = scmp.eq.s32.totalorder %s29, 0
      %p198 = por %p196, %p197
      %s199 = ssub.s32 %s31, %s38
      %p200 = scmp.eq.s32.totalorder %s199, 0
      %s202 = sadd.s32 %s201, 1
      %s203 = scalar_select %p200, %s201, %s202
      %p206 = pneg %p200
      %p207 = scmp.eq.s32.totalorder %s23, 1
      %p208 = por %p206, %p207
      %p209 = scmp.ne.s32.totalorder %s201, %s204
      %p210 = scmp.eq.s32.totalorder %s23, 0
      %p211 = por %p209, %p210
      %p212 = scmp.ne.s32.totalorder %s201, %s204
      %p213 = scmp.eq.s32.totalorder %s28, 1
      %p214 = por %p212, %p213
      %p215 = scmp.ne.s32.totalorder %s204, %s205
      %p216 = scmp.eq.s32.totalorder %s28, 0
      %p217 = por %p215, %p216
      %p218 = scmp.ne.s32.totalorder %s204, %s205
      %p219 = scmp.eq.s32.totalorder %s29, 1
      %p220 = por %p218, %p219
      %p222 = scmp.ne.s32.totalorder %s205, %s221
      %p223 = scmp.eq.s32.totalorder %s29, 0
      %p224 = por %p222, %p223
      %s225 = ssub.s32 %s31, %s38
      %p226 = scmp.eq.s32.totalorder %s225, 0
      %s228 = sadd.s32 %s227, 1
      %s229 = scalar_select %p226, %s227, %s228
      %p232 = pneg %p226
      %p233 = scmp.eq.s32.totalorder %s23, 1
      %p234 = por %p232, %p233
      %p235 = scmp.ne.s32.totalorder %s227, %s230
      %p236 = scmp.eq.s32.totalorder %s23, 0
      %p237 = por %p235, %p236
      %p238 = scmp.ne.s32.totalorder %s227, %s230
      %p239 = scmp.eq.s32.totalorder %s28, 1
      %p240 = por %p238, %p239
      %p241 = scmp.ne.s32.totalorder %s230, %s231
      %p242 = scmp.eq.s32.totalorder %s28, 0
      %p243 = por %p241, %p242
      %p244 = scmp.ne.s32.totalorder %s230, %s231
      %p245 = scmp.eq.s32.totalorder %s29, 1
      %p246 = por %p244, %p245
      %p248 = scmp.ne.s32.totalorder %s231, %s247
      %p249 = scmp.eq.s32.totalorder %s29, 0
      %p250 = por %p248, %p249
      %s251 = ssub.s32 %s31, %s38
      %p252 = scmp.eq.s32.totalorder %s251, 0
      %s254 = sadd.s32 %s253, 1
      %s255 = scalar_select %p252, %s253, %s254
      %p258 = pneg %p252
      %p259 = scmp.eq.s32.totalorder %s23, 1
      %p260 = por %p258, %p259
      %p261 = scmp.ne.s32.totalorder %s253, %s256
      %p262 = scmp.eq.s32.totalorder %s23, 0
      %p263 = por %p261, %p262
      %p264 = scmp.ne.s32.totalorder %s253, %s256
      %p265 = scmp.eq.s32.totalorder %s28, 1
      %p266 = por %p264, %p265
      %p267 = scmp.ne.s32.totalorder %s256, %s257
      %p268 = scmp.eq.s32.totalorder %s28, 0
      %p269 = por %p267, %p268
      %p270 = scmp.ne.s32.totalorder %s256, %s257
      %p271 = scmp.eq.s32.totalorder %s29, 1
      %p272 = por %p270, %p271
      %p274 = scmp.ne.s32.totalorder %s257, %s273
      %p275 = scmp.eq.s32.totalorder %s29, 0
      %p276 = por %p274, %p275
      %s277 = ssub.s32 %s31, %s38
      %p278 = scmp.eq.s32.totalorder %s277, 0
      %s280 = sadd.s32 %s279, 1
      %s281 = scalar_select %p278, %s279, %s280
      %p284 = pneg %p278
      %p285 = scmp.eq.s32.totalorder %s23, 1
      %p286 = por %p284, %p285
      %p287 = scmp.ne.s32.totalorder %s279, %s282
      %p288 = scmp.eq.s32.totalorder %s23, 0
      %p289 = por %p287, %p288
      %p290 = scmp.ne.s32.totalorder %s279, %s282
      %p291 = scmp.eq.s32.totalorder %s28, 1
      %p292 = por %p290, %p291
      %p293 = scmp.ne.s32.totalorder %s282, %s283
      %p294 = scmp.eq.s32.totalorder %s28, 0
      %p295 = por %p293, %p294
      %p296 = scmp.ne.s32.totalorder %s282, %s283
      %p297 = scmp.eq.s32.totalorder %s29, 1
      %p298 = por %p296, %p297
      %p300 = scmp.ne.s32.totalorder %s283, %s299
      %p301 = scmp.eq.s32.totalorder %s29, 0
      %p302 = por %p300, %p301
      %s303 = ssub.s32 %s31, %s38
      %p304 = scmp.eq.s32.totalorder %s303, 0
      %s306 = sadd.s32 %s305, 1
      %s307 = scalar_select %p304, %s305, %s306
      %p310 = pneg %p304
      %p311 = scmp.eq.s32.totalorder %s23, 1
      %p312 = por %p310, %p311
      %p313 = scmp.ne.s32.totalorder %s305, %s308
      %p314 = scmp.eq.s32.totalorder %s23, 0
      %p315 = por %p313, %p314
      %p316 = scmp.ne.s32.totalorder %s305, %s308
      %p317 = scmp.eq.s32.totalorder %s28, 1
      %p318 = por %p316, %p317
      %p319 = scmp.ne.s32.totalorder %s308, %s309
      %p320 = scmp.eq.s32.totalorder %s28, 0
      %p321 = por %p319, %p320
      %p322 = scmp.ne.s32.totalorder %s308, %s309
      %p323 = scmp.eq.s32.totalorder %s29, 1
      %p324 = por %p322, %p323
      %p326 = scmp.ne.s32.totalorder %s309, %s325
      %p327 = scmp.eq.s32.totalorder %s29, 0
      %p328 = por %p326, %p327
      %s329 = ssub.s32 %s31, %s38
      %p330 = scmp.eq.s32.totalorder %s329, 0
      %s332 = sadd.s32 %s331, 1
      %s333 = scalar_select %p330, %s331, %s332
      %p336 = pneg %p330
      %p337 = scmp.eq.s32.totalorder %s23, 1
      %p338 = por %p336, %p337
      %p339 = scmp.ne.s32.totalorder %s331, %s334
      %p340 = scmp.eq.s32.totalorder %s23, 0
      %p341 = por %p339, %p340
      %p342 = scmp.ne.s32.totalorder %s331, %s334
      %p343 = scmp.eq.s32.totalorder %s28, 1
      %p344 = por %p342, %p343
      %p345 = scmp.ne.s32.totalorder %s334, %s335
      %p346 = scmp.eq.s32.totalorder %s28, 0
      %p347 = por %p345, %p346
      %p348 = scmp.ne.s32.totalorder %s334, %s335
      %p349 = scmp.eq.s32.totalorder %s29, 1
      %p350 = por %p348, %p349
      %p352 = scmp.ne.s32.totalorder %s335, %s351
      %p353 = scmp.eq.s32.totalorder %s29, 0
      %p354 = por %p352, %p353
      %s355 = ssub.s32 %s31, %s38
      %p356 = scmp.eq.s32.totalorder %s355, 0
      %s358 = sadd.s32 %s357, 1
      %s359 = scalar_select %p356, %s357, %s358
      %p362 = pneg %p356
      %p363 = scmp.eq.s32.totalorder %s23, 1
      %p364 = por %p362, %p363
      %p365 = scmp.ne.s32.totalorder %s357, %s360
      %p366 = scmp.eq.s32.totalorder %s23, 0
      %p367 = por %p365, %p366
      %p368 = scmp.ne.s32.totalorder %s357, %s360
      %p369 = scmp.eq.s32.totalorder %s28, 1
      %p370 = por %p368, %p369
      %p371 = scmp.ne.s32.totalorder %s360, %s361
      %p372 = scmp.eq.s32.totalorder %s28, 0
      %p373 = por %p371, %p372
      %p374 = scmp.ne.s32.totalorder %s360, %s361
      %p375 = scmp.eq.s32.totalorder %s29, 1
      %p376 = por %p374, %p375
      %p378 = scmp.ne.s32.totalorder %s361, %s377
      %p379 = scmp.eq.s32.totalorder %s29, 0
      %p380 = por %p378, %p379
      %s381 = ssub.s32 %s31, %s38
      %p382 = scmp.eq.s32.totalorder %s381, 0
      %s384 = sadd.s32 %s383, 1
      %s385 = scalar_select %p382, %s383, %s384
      %p388 = pneg %p382
      %p389 = scmp.eq.s32.totalorder %s23, 1
      %p390 = por %p388, %p389
      %p391 = scmp.ne.s32.totalorder %s383, %s386
      %p392 = scmp.eq.s32.totalorder %s23, 0
      %p393 = por %p391, %p392
      %p394 = scmp.ne.s32.totalorder %s383, %s386
      %p395 = scmp.eq.s32.totalorder %s28, 1
      %p396 = por %p394, %p395
      %p397 = scmp.ne.s32.totalorder %s386, %s387
      %p398 = scmp.eq.s32.totalorder %s28, 0
      %p399 = por %p397, %p398
      %p400 = scmp.ne.s32.totalorder %s386, %s387
      %p401 = scmp.eq.s32.totalorder %s29, 1
      %p402 = por %p400, %p401
      %p404 = scmp.ne.s32.totalorder %s387, %s403
      %p405 = scmp.eq.s32.totalorder %s29, 0
      %p406 = por %p404, %p405
      %s408 = sadd.s32 %s407, 1
      %p411 = scmp.eq.s32.totalorder %s23, 1
      %p412 = scmp.ne.s32.totalorder %s407, %s409
      %p413 = scmp.eq.s32.totalorder %s23, 0
      %p414 = por %p412, %p413
      %p415 = scmp.ne.s32.totalorder %s407, %s409
      %p416 = scmp.eq.s32.totalorder %s28, 1
      %p417 = por %p415, %p416
      %p418 = scmp.ne.s32.totalorder %s409, %s410
      %p419 = scmp.eq.s32.totalorder %s28, 0
      %p420 = por %p418, %p419
      %p421 = scmp.ne.s32.totalorder %s409, %s410
      %p422 = scmp.eq.s32.totalorder %s29, 1
      %p423 = por %p421, %p422
      %p425 = scmp.ne.s32.totalorder %s410, %s424
      %p426 = scmp.eq.s32.totalorder %s29, 0
      %p427 = por %p425, %p426
      %s429 = sadd.s32 %s428, 1
      %p432 = scmp.eq.s32.totalorder %s23, 1
      %p433 = scmp.ne.s32.totalorder %s428, %s430
      %p434 = scmp.eq.s32.totalorder %s23, 0
      %p435 = por %p433, %p434
      %p436 = scmp.ne.s32.totalorder %s428, %s430
      %p437 = scmp.eq.s32.totalorder %s28, 1
      %p438 = por %p436, %p437
      %p439 = scmp.ne.s32.totalorder %s430, %s431
      %p440 = scmp.eq.s32.totalorder %s28, 0
      %p441 = por %p439, %p440
      %p442 = scmp.ne.s32.totalorder %s430, %s431
      %p443 = scmp.eq.s32.totalorder %s29, 1
      %p444 = por %p442, %p443
      %p446 = scmp.ne.s32.totalorder %s431, %s445
      %p447 = scmp.eq.s32.totalorder %s29, 0
      %p448 = por %p446, %p447
      %s449 = ssub.s32 %s30, %s42
      %p450 = scmp.eq.s32.totalorder %s449, 0
      %s452 = sadd.s32 %s451, 1
      %s453 = scalar_select %p450, %s451, %s452
      %p456 = pneg %p450
      %p457 = scmp.eq.s32.totalorder %s23, 1
      %p458 = por %p456, %p457
      %p459 = scmp.ne.s32.totalorder %s451, %s454
      %p460 = scmp.eq.s32.totalorder %s23, 0
      %p461 = por %p459, %p460
      %p462 = scmp.ne.s32.totalorder %s451, %s454
      %p463 = scmp.eq.s32.totalorder %s28, 1
      %p464 = por %p462, %p463
      %p465 = scmp.ne.s32.totalorder %s454, %s455
      %p466 = scmp.eq.s32.totalorder %s28, 0
      %p467 = por %p465, %p466
      %p468 = scmp.ne.s32.totalorder %s454, %s455
      %p469 = scmp.eq.s32.totalorder %s29, 1
      %p470 = por %p468, %p469
      %p472 = scmp.ne.s32.totalorder %s455, %s471
      %p473 = scmp.eq.s32.totalorder %s29, 0
      %p474 = por %p472, %p473
      %p475 = scmp.le.s32.totalorder 1, %s23
      %p476 = scmp.lt.s32.totalorder %s23, 3
      %p477 = pnand %p475, %p476
      %p478 = pneg %p477
      // Predicated region
      $region9: #{encoder_forward.1} parent=5 // pred_check
        _
      $region10: #{encoder_forward.1} parent=5 // pred_check_branch
        %480 = sbr.rel (%p477) target = $region12
      $region11: #{encoder_forward.1} parent=5 // pred_region
        %s481 = ssub.s32 %s23, 1
        // Predicated region
        $region13: #{encoder_forward.1} parent=11 // pred_check
          %p482 = pneg %p61
        $region14: #{encoder_forward.1} parent=11 // pred_check_branch
          %484 = sbr.rel (%p482) target = $region16
        $region15: #{encoder_forward.1} parent=11 // pred_region
          %s485 = smul.u32 2, %s32
          %p486 = scmp.lt.s32.totalorder %s485, 1
          %s487 = scalar_select %p486, %s485, 1
          %s488 = smul.addr %s487, 8
          %s489 = scalar_lea.vmem %s0, %s488
          %s490 = smul.u32 2, %s32
        $region16: #{encoder_forward.1} parent=11 // pred_fallthru
          _
        // Predicated region
        $region17: #{encoder_forward.1} parent=11 // pred_check
          %p491 = pneg %p87
        $region18: #{encoder_forward.1} parent=11 // pred_check_branch
          %493 = sbr.rel (%p491) target = $region20
        $region19: #{encoder_forward.1} parent=11 // pred_region
          %s494 = smul.u32 2, %s32
          %p495 = scmp.lt.s32.totalorder %s494, 1
          %s496 = scalar_select %p495, %s494, 1
          %s497 = smul.addr %s496, 8
          %s498 = scalar_lea.vmem %s1, %s497
          %s499 = smul.u32 2, %s32
        $region20: #{encoder_forward.1} parent=11 // pred_fallthru
          _
        // Predicated region
        $region21: #{encoder_forward.1} parent=11 // pred_check
          %p500 = pneg %p420
        $region22: #{encoder_forward.1} parent=11 // pred_check_branch
          %502 = sbr.rel (%p500) target = $region24
        $region23: #{encoder_forward.1} parent=11 // pred_region
          _
        $region24: #{encoder_forward.1} parent=11 // pred_fallthru
          _
        // Predicated region
        $region25: #{encoder_forward.1} parent=11 // pred_check
          %p503 = pneg %p441
        $region26: #{encoder_forward.1} parent=11 // pred_check_branch
          %505 = sbr.rel (%p503) target = $region28
        $region27: #{encoder_forward.1} parent=11 // pred_region
          _
        $region28: #{encoder_forward.1} parent=11 // pred_fallthru
          _
      $region12: #{encoder_forward.1} parent=5 // pred_fallthru
        _
      %p506 = scmp.lt.s32.totalorder %s23, 2
      // Predicated region
      $region29: #{encoder_forward.1} parent=5 // pred_check
        %p507 = pneg %p506
      $region30: #{encoder_forward.1} parent=5 // pred_check_branch
        %509 = sbr.rel (%p507) target = $region32
      $region31: #{encoder_forward.1} parent=5 // pred_region
        // Predicated region
        $region33: #{encoder_forward.1} parent=31 // pred_check
          %p510 = pneg %p107
        $region34: #{encoder_forward.1} parent=31 // pred_check_branch
          %512 = sbr.rel (%p510) target = $region36
        $region35: #{encoder_forward.1} parent=31 // pred_region
          %p513 = scmp.lt.s32.totalorder %s31, 1
          %s514 = scalar_select %p513, %s31, 1
          %s515 = smul.addr %s514, 4
          %s516 = smul.addr %s515, 8
          %s517 = scalar_lea.vmem %s2, %s516
        $region36: #{encoder_forward.1} parent=31 // pred_fallthru
          _
        // Predicated region
        $region37: #{encoder_forward.1} parent=31 // pred_check
          %p518 = pneg %p133
        $region38: #{encoder_forward.1} parent=31 // pred_check_branch
          %520 = sbr.rel (%p518) target = $region40
        $region39: #{encoder_forward.1} parent=31 // pred_region
          %p521 = scmp.lt.s32.totalorder %s31, 1
          %s522 = scalar_select %p521, %s31, 1
          %s523 = scalar_lea.vmem %s3, %s522
        $region40: #{encoder_forward.1} parent=31 // pred_fallthru
          _
        // Predicated region
        $region41: #{encoder_forward.1} parent=31 // pred_check
          %p524 = pneg %p159
        $region42: #{encoder_forward.1} parent=31 // pred_check_branch
          %526 = sbr.rel (%p524) target = $region44
        $region43: #{encoder_forward.1} parent=31 // pred_region
          %p527 = scmp.lt.s32.totalorder %s31, 1
          %s528 = scalar_select %p527, %s31, 1
          %s529 = smul.addr %s528, 4
          %s530 = smul.addr %s529, 8
          %s531 = scalar_lea.vmem %s4, %s530
        $region44: #{encoder_forward.1} parent=31 // pred_fallthru
          _
        // Predicated region
        $region45: #{encoder_forward.1} parent=31 // pred_check
          %p532 = pneg %p185
        $region46: #{encoder_forward.1} parent=31 // pred_check_branch
          %534 = sbr.rel (%p532) target = $region48
        $region47: #{encoder_forward.1} parent=31 // pred_region
          %p535 = scmp.lt.s32.totalorder %s31, 1
          %s536 = scalar_select %p535, %s31, 1
          %s537 = scalar_lea.vmem %s5, %s536
        $region48: #{encoder_forward.1} parent=31 // pred_fallthru
          _
        // Predicated region
        $region49: #{encoder_forward.1} parent=31 // pred_check
          %p538 = pneg %p211
        $region50: #{encoder_forward.1} parent=31 // pred_check_branch
          %540 = sbr.rel (%p538) target = $region52
        $region51: #{encoder_forward.1} parent=31 // pred_region
          %p541 = scmp.lt.s32.totalorder %s31, 1
          %s542 = scalar_select %p541, %s31, 1
          %s543 = scalar_lea.vmem %s6, %s542
        $region52: #{encoder_forward.1} parent=31 // pred_fallthru
          _
        // Predicated region
        $region53: #{encoder_forward.1} parent=31 // pred_check
          %p544 = pneg %p237
        $region54: #{encoder_forward.1} parent=31 // pred_check_branch
          %546 = sbr.rel (%p544) target = $region56
        $region55: #{encoder_forward.1} parent=31 // pred_region
          %p547 = scmp.lt.s32.totalorder %s31, 1
          %s548 = scalar_select %p547, %s31, 1
          %s549 = scalar_lea.vmem %s7, %s548
        $region56: #{encoder_forward.1} parent=31 // pred_fallthru
          _
        // Predicated region
        $region57: #{encoder_forward.1} parent=31 // pred_check
          %p550 = pneg %p263
        $region58: #{encoder_forward.1} parent=31 // pred_check_branch
          %552 = sbr.rel (%p550) target = $region60
        $region59: #{encoder_forward.1} parent=31 // pred_region
          %p553 = scmp.lt.s32.totalorder %s31, 1
          %s554 = scalar_select %p553, %s31, 1
          %s555 = smul.addr %s554, 4
          %s556 = smul.addr %s555, 8
          %s557 = scalar_lea.vmem %s8, %s556
        $region60: #{encoder_forward.1} parent=31 // pred_fallthru
          _
        // Predicated region
        $region61: #{encoder_forward.1} parent=31 // pred_check
          %p558 = pneg %p289
        $region62: #{encoder_forward.1} parent=31 // pred_check_branch
          %560 = sbr.rel (%p558) target = $region64
        $region63: #{encoder_forward.1} parent=31 // pred_region
          %p561 = scmp.lt.s32.totalorder %s31, 1
          %s562 = scalar_select %p561, %s31, 1
          %s563 = scalar_lea.vmem %s9, %s562
        $region64: #{encoder_forward.1} parent=31 // pred_fallthru
          _
        // Predicated region
        $region65: #{encoder_forward.1} parent=31 // pred_check
          %p564 = pneg %p315
        $region66: #{encoder_forward.1} parent=31 // pred_check_branch
          %566 = sbr.rel (%p564) target = $region68
        $region67: #{encoder_forward.1} parent=31 // pred_region
          %p567 = scmp.lt.s32.totalorder %s31, 1
          %s568 = scalar_select %p567, %s31, 1
          %s569 = smul.addr %s568, 8
          %s570 = smul.addr %s569, 8
          %s571 = scalar_lea.vmem %s10, %s570
        $region68: #{encoder_forward.1} parent=31 // pred_fallthru
          _
        // Predicated region
        $region69: #{encoder_forward.1} parent=31 // pred_check
          %p572 = pneg %p341
        $region70: #{encoder_forward.1} parent=31 // pred_check_branch
          %574 = sbr.rel (%p572) target = $region72
        $region71: #{encoder_forward.1} parent=31 // pred_region
          %p575 = scmp.lt.s32.totalorder %s31, 1
          %s576 = scalar_select %p575, %s31, 1
          %s577 = scalar_lea.vmem %s11, %s576
        $region72: #{encoder_forward.1} parent=31 // pred_fallthru
          _
        // Predicated region
        $region73: #{encoder_forward.1} parent=31 // pred_check
          %p578 = pneg %p367
        $region74: #{encoder_forward.1} parent=31 // pred_check_branch
          %580 = sbr.rel (%p578) target = $region76
        $region75: #{encoder_forward.1} parent=31 // pred_region
          %p581 = scmp.lt.s32.totalorder %s31, 1
          %s582 = scalar_select %p581, %s31, 1
          %s583 = scalar_lea.vmem %s12, %s582
        $region76: #{encoder_forward.1} parent=31 // pred_fallthru
          _
        // Predicated region
        $region77: #{encoder_forward.1} parent=31 // pred_check
          %p584 = pneg %p393
        $region78: #{encoder_forward.1} parent=31 // pred_check_branch
          %586 = sbr.rel (%p584) target = $region80
        $region79: #{encoder_forward.1} parent=31 // pred_region
          %p587 = scmp.lt.s32.totalorder %s31, 1
          %s588 = scalar_select %p587, %s31, 1
          %s589 = scalar_lea.vmem %s13, %s588
        $region80: #{encoder_forward.1} parent=31 // pred_fallthru
          _
      $region32: #{encoder_forward.1} parent=5 // pred_fallthru
        _
      %p590 = scmp.le.s32.totalorder 1, %s23
      %p591 = scmp.lt.s32.totalorder %s23, 3
      %p592 = pnand %p590, %p591
      %p593 = pneg %p592
      // Predicated region
      $region81: #{encoder_forward.1} parent=5 // pred_check
        _
      $region82: #{encoder_forward.1} parent=5 // pred_check_branch
        %595 = sbr.rel (%p592) target = $region84
      $region83: #{encoder_forward.1} parent=5 // pred_region
        %s596 = ssub.s32 %s23, 1
        %s597 = smul.u32 2, %s32
        %p598 = scmp.lt.s32.totalorder %s597, 1
        %s599 = scalar_select %p598, %s597, 1
        %s600 = smul.addr %s599, 8
        %s601 = scalar_lea.vmem %s0, %s600
        %p602 = pneg %p61
        %p603 = pneg %p58
        %s604 = smul.u32 2, %s32
        %p605 = scmp.lt.s32.totalorder %s604, 1
        %s606 = scalar_select %p605, %s604, 1
        %s607 = smul.addr %s606, 8
        %s608 = scalar_lea.vmem %s1, %s607
        %p609 = pneg %p87
        %p610 = pneg %p84
        %p611 = scmp.lt.s32.totalorder %s33, 1
        %s612 = scalar_select %p611, %s33, 1
        %s613 = smul.addr %s612, 4
        %s614 = smul.addr %s613, 8
        %s615 = scalar_lea.vmem %s2, %s614
        %p616 = pneg %p113
        %p617 = pneg %p110
        %p618 = scmp.lt.s32.totalorder %s33, 1
        %s619 = scalar_select %p618, %s33, 1
        %s620 = scalar_lea.vmem %s3, %s619
        %p621 = pneg %p139
        %p622 = pneg %p136
        %p623 = scmp.lt.s32.totalorder %s33, 1
        %s624 = scalar_select %p623, %s33, 1
        %s625 = smul.addr %s624, 4
        %s626 = smul.addr %s625, 8
        %s627 = scalar_lea.vmem %s4, %s626
        %p628 = pneg %p165
        %p629 = pneg %p162
        %p630 = scmp.lt.s32.totalorder %s33, 1
        %s631 = scalar_select %p630, %s33, 1
        %s632 = scalar_lea.vmem %s5, %s631
        %p633 = pneg %p191
        %p634 = pneg %p188
        %p635 = scmp.lt.s32.totalorder %s33, 1
        %s636 = scalar_select %p635, %s33, 1
        %s637 = scalar_lea.vmem %s6, %s636
        %p638 = pneg %p217
        %p639 = pneg %p214
        %p640 = scmp.lt.s32.totalorder %s33, 1
        %s641 = scalar_select %p640, %s33, 1
        %s642 = scalar_lea.vmem %s7, %s641
        %p643 = pneg %p243
        %p644 = pneg %p240
        %p645 = scmp.lt.s32.totalorder %s33, 1
        %s646 = scalar_select %p645, %s33, 1
        %s647 = smul.addr %s646, 4
        %s648 = smul.addr %s647, 8
        %s649 = scalar_lea.vmem %s8, %s648
        %p650 = pneg %p269
        %p651 = pneg %p266
        %p652 = scmp.lt.s32.totalorder %s33, 1
        %s653 = scalar_select %p652, %s33, 1
        %s654 = scalar_lea.vmem %s9, %s653
        %p655 = pneg %p295
        %p656 = pneg %p292
        %p657 = scmp.lt.s32.totalorder %s33, 1
        %s658 = scalar_select %p657, %s33, 1
        %s659 = smul.addr %s658, 8
        %s660 = smul.addr %s659, 8
        %s661 = scalar_lea.vmem %s10, %s660
        %p662 = pneg %p321
        %p663 = pneg %p318
        %p664 = scmp.lt.s32.totalorder %s33, 1
        %s665 = scalar_select %p664, %s33, 1
        %s666 = scalar_lea.vmem %s11, %s665
        %p667 = pneg %p347
        %p668 = pneg %p344
        %p669 = scmp.lt.s32.totalorder %s33, 1
        %s670 = scalar_select %p669, %s33, 1
        %s671 = scalar_lea.vmem %s12, %s670
        %p672 = pneg %p373
        %p673 = pneg %p370
        %p674 = scmp.lt.s32.totalorder %s33, 1
        %s675 = scalar_select %p674, %s33, 1
        %s676 = scalar_lea.vmem %s13, %s675
        %p677 = pneg %p399
        %p678 = pneg %p396
        %p679 = pneg %p420
        %p680 = pneg %p417
        %p681 = pneg %p441
        %p682 = pneg %p438
        %p683 = pneg %p467
        %p684 = pneg %p464
        %s685 = smul.u32 2, %s32
        %p686 = scmp.lt.s32.totalorder %s685, 1
        %s687 = scalar_select %p686, %s685, 1
        %s688 = smul.addr %s687, 8
        %s689 = scalar_lea.vmem %s0, %s688
        %s690 = smul.u32 2, %s32
        %s691 = smul.u32 2, %s32
        %p692 = scmp.lt.s32.totalorder %s691, 1
        %s693 = scalar_select %p692, %s691, 1
        %s694 = smul.addr %s693, 8
        %s695 = scalar_lea.vmem %s1, %s694
        %s696 = smul.u32 2, %s32
        %p697 = scmp.lt.s32.totalorder %s33, 1
        %s698 = scalar_select %p697, %s33, 1
        %s699 = smul.addr %s698, 4
        %s700 = smul.addr %s699, 8
        %s701 = scalar_lea.vmem %s2, %s700
        %p702 = scmp.lt.s32.totalorder %s33, 1
        %s703 = scalar_select %p702, %s33, 1
        %s704 = scalar_lea.vmem %s3, %s703
        %p705 = scmp.lt.s32.totalorder %s33, 1
        %s706 = scalar_select %p705, %s33, 1
        %s707 = smul.addr %s706, 4
        %s708 = smul.addr %s707, 8
        %s709 = scalar_lea.vmem %s4, %s708
        %p710 = scmp.lt.s32.totalorder %s33, 1
        %s711 = scalar_select %p710, %s33, 1
        %s712 = scalar_lea.vmem %s5, %s711
        %p713 = scmp.lt.s32.totalorder %s33, 1
        %s714 = scalar_select %p713, %s33, 1
        %s715 = scalar_lea.vmem %s6, %s714
        %p716 = scmp.lt.s32.totalorder %s33, 1
        %s717 = scalar_select %p716, %s33, 1
        %s718 = scalar_lea.vmem %s7, %s717
        %p719 = scmp.lt.s32.totalorder %s33, 1
        %s720 = scalar_select %p719, %s33, 1
        %s721 = smul.addr %s720, 4
        %s722 = smul.addr %s721, 8
        %s723 = scalar_lea.vmem %s8, %s722
        %p724 = scmp.lt.s32.totalorder %s33, 1
        %s725 = scalar_select %p724, %s33, 1
        %s726 = scalar_lea.vmem %s9, %s725
        %p727 = scmp.lt.s32.totalorder %s33, 1
        %s728 = scalar_select %p727, %s33, 1
        %s729 = smul.addr %s728, 8
        %s730 = smul.addr %s729, 8
        %s731 = scalar_lea.vmem %s10, %s730
        %p732 = scmp.lt.s32.totalorder %s33, 1
        %s733 = scalar_select %p732, %s33, 1
        %s734 = scalar_lea.vmem %s11, %s733
        %p735 = scmp.lt.s32.totalorder %s33, 1
        %s736 = scalar_select %p735, %s33, 1
        %s737 = scalar_lea.vmem %s12, %s736
        %p738 = scmp.lt.s32.totalorder %s33, 1
        %s739 = scalar_select %p738, %s33, 1
        %s740 = scalar_lea.vmem %s13, %s739
        %s741 = smul.u32 2, %s32
        %p742 = scmp.eq.s32.totalorder %s33, 0
        // Predicated region
        $region85: #{encoder_forward.1} parent=83 // pred_check
          %p743 = pneg %p742
        $region86: #{encoder_forward.1} parent=83 // pred_check_branch
          %745 = sbr.rel (%p743) target = $region88
        $region87: #{encoder_forward.1} parent=83 // pred_region
          %v746 = vld [vmem:[%s689] sm:$0xff]
          %v747 = vld [vmem:[%s689 + $0x8] sm:$0xff]
          %vm748 = vcmask 261120
          %749 = vst.msk [vmem:[#allocation2] sm:$0xff] %vm748, %v746
          %750 = vst.msk [vmem:[#allocation2 + $0x8] sm:$0xff] %vm748, %v747
        $region88: #{encoder_forward.1} parent=83 // pred_fallthru
          _
        %v751 = vld [vmem:[#allocation2] sm:$0xff]
        %v752 = vld [vmem:[#allocation2 + $0x8] sm:$0xff]
        %v753 = vld [vmem:[%s701] sm:$0xff]
        %v754 = vld [vmem:[%s701 + $0x8] sm:$0xff]
        %v755 = vld [vmem:[%s701 + $0x10] sm:$0xff]
        %v756 = vld [vmem:[%s701 + $0x18] sm:$0xff]
        %v757 = vld [vmem:[%s704] sm:$0x1]
        %v759 = vperm.slane %v757, 0
        %vm761 = vcmask 261120
        %v763 = vsel %vm761, %v751, 0
        %v766 = vsel %vm761, %v752, 0
        %768 = vmatpush.msra.mxu0 0.0
        %769 = vmatpush.msra.mxu0 0.0
        %770 = vmatpush.msra.mxu0 0.0
        %771 = vmatpush.msra.mxu0 0.0
        %772 = vmatpush.msra.mxu0 0.0
        %773 = vmatpush.msra.mxu0 0.0
        %774 = vmatpush.msra.mxu0 0.0
        %775 = vmatpush.msra.mxu0 0.0
        %776 = vmatpush.msra.mxu0 0.0
        %777 = vmatpush.msra.mxu0 0.0
        %778 = vmatpush.msra.mxu0 0.0
        %779 = vmatpush.msra.mxu0 0.0
        %780 = vmatpush.msra.mxu0 %v756
        %781 = vmatpush.msra.mxu0 %v755
        %782 = vmatpush.msra.mxu0 %v754
        %783 = vmatpush.msra.mxu0 %v753
        %784 = vmatmul.f32.gmra.mxu0 %v763
        %v785 = vpop.f32.mrf.mxu0
        %v786 = vadd.f32 %v759, %v785
        %787 = vmatmul.f32.gmra.mxu0 %v766
        %v788 = vpop.f32.mrf.mxu0
        %v789 = vadd.f32 %v759, %v788
        %790 = vdwg.mxu0
        %793 = vrot.lane.b32.xlu0 %v786, 104
        %v794 = vpop.permute.xlu0 %793
        %795 = vrot.lane.b32.xlu0 %v789, 104
        %v796 = vpop.permute.xlu0 %795
        %797 = vrot.lane.b32.xlu0 %v786, 80
        %v798 = vpop.permute.xlu0 %797
        %799 = vrot.lane.b32.xlu0 %v789, 80
        %v800 = vpop.permute.xlu0 %799
        %801 = vrot.lane.b32.xlu0 %v786, 56
        %v802 = vpop.permute.xlu0 %801
        %803 = vrot.lane.b32.xlu0 %v789, 56
        %v804 = vpop.permute.xlu0 %803
        %v805 = vld [vmem:[%s695] sm:$0xff]
        %v806 = vld [vmem:[%s695 + $0x8] sm:$0xff]
        %807 = vrot.lane.b32.xlu0 %v786, 120
        %v808 = vpop.permute.xlu0 %807
        %vm809 = vcmask 64512
        %v810 = vsel %vm809, %v786, 0
        %v812 = vsel %vm809, %v808, 0
        %814 = vmatpush.xpose.msra.mxu0 0.0
        %815 = vmatpush.xpose.msra.mxu0 0.0
        %816 = vmatpush.xpose.msra.mxu0 0.0
        %817 = vmatpush.xpose.msra.mxu0 0.0
        %818 = vmatpush.xpose.msra.mxu0 0.0
        %819 = vmatpush.xpose.msra.mxu0 0.0
        %820 = vmatpush.xpose.msra.mxu0 0.0
        %821 = vmatpush.xpose.msra.mxu0 0.0
        %822 = vmatpush.xpose.msra.mxu0 0.0
        %823 = vmatpush.xpose.msra.mxu0 0.0
        %824 = vmatpush.xpose.msra.mxu0 0.0
        %825 = vmatpush.xpose.msra.mxu0 0.0
        %826 = vmatpush.xpose.msra.mxu0 0.0
        %827 = vmatpush.xpose.msra.mxu0 0.0
        %828 = vmatpush.xpose.msra.mxu0 0.0
        %829 = vmatpush.xpose.msra.mxu0 %v812
        %830 = vmatmul.f32.gmra.mxu0 %v810
        %v831 = vpop.f32.mrf.mxu0
        %v832 = vadd.f32 %v805, %v831
        %833 = vdwg.mxu0
        %834 = vrot.lane.b32.xlu0 %v789, 120
        %v835 = vpop.permute.xlu0 %834
        %v836 = vsel %vm809, %v789, 0
        %v838 = vsel %vm809, %v835, 0
        %840 = vmatpush.xpose.msra.mxu0 0.0
        %841 = vmatpush.xpose.msra.mxu0 0.0
        %842 = vmatpush.xpose.msra.mxu0 0.0
        %843 = vmatpush.xpose.msra.mxu0 0.0
        %844 = vmatpush.xpose.msra.mxu0 0.0
        %845 = vmatpush.xpose.msra.mxu0 0.0
        %846 = vmatpush.xpose.msra.mxu0 0.0
        %847 = vmatpush.xpose.msra.mxu0 0.0
        %848 = vmatpush.xpose.msra.mxu0 0.0
        %849 = vmatpush.xpose.msra.mxu0 0.0
        %850 = vmatpush.xpose.msra.mxu0 0.0
        %851 = vmatpush.xpose.msra.mxu0 0.0
        %852 = vmatpush.xpose.msra.mxu0 0.0
        %853 = vmatpush.xpose.msra.mxu0 0.0
        %854 = vmatpush.xpose.msra.mxu0 0.0
        %855 = vmatpush.xpose.msra.mxu0 %v838
        %856 = vmatmul.f32.gmra.mxu0 %v836
        %v857 = vpop.f32.mrf.mxu0
        %v858 = vadd.f32 %v806, %v857
        %859 = vdwg.mxu0
        %860 = vrot.lane.b32.xlu0 %v794, 120
        %v861 = vpop.permute.xlu0 %860
        %v862 = vsel %vm809, %v794, 0
        %v864 = vsel %vm809, %v861, 0
        %866 = vmatpush.xpose.msra.mxu0 0.0
        %867 = vmatpush.xpose.msra.mxu0 0.0
        %868 = vmatpush.xpose.msra.mxu0 0.0
        %869 = vmatpush.xpose.msra.mxu0 0.0
        %870 = vmatpush.xpose.msra.mxu0 0.0
        %871 = vmatpush.xpose.msra.mxu0 0.0
        %872 = vmatpush.xpose.msra.mxu0 0.0
        %873 = vmatpush.xpose.msra.mxu0 0.0
        %874 = vmatpush.xpose.msra.mxu0 0.0
        %875 = vmatpush.xpose.msra.mxu0 0.0
        %876 = vmatpush.xpose.msra.mxu0 0.0
        %877 = vmatpush.xpose.msra.mxu0 0.0
        %878 = vmatpush.xpose.msra.mxu0 0.0
        %879 = vmatpush.xpose.msra.mxu0 0.0
        %880 = vmatpush.xpose.msra.mxu0 0.0
        %881 = vmatpush.xpose.msra.mxu0 %v864
        %882 = vmatmul.f32.gmra.mxu0 %v862
        %v883 = vpop.f32.mrf.mxu0
        %v884 = vadd.f32 %v805, %v883
        %885 = vdwg.mxu0
        %886 = vrot.lane.b32.xlu0 %v796, 120
        %v887 = vpop.permute.xlu0 %886
        %v888 = vsel %vm809, %v796, 0
        %v890 = vsel %vm809, %v887, 0
        %892 = vmatpush.xpose.msra.mxu0 0.0
        %893 = vmatpush.xpose.msra.mxu0 0.0
        %894 = vmatpush.xpose.msra.mxu0 0.0
        %895 = vmatpush.xpose.msra.mxu0 0.0
        %896 = vmatpush.xpose.msra.mxu0 0.0
        %897 = vmatpush.xpose.msra.mxu0 0.0
        %898 = vmatpush.xpose.msra.mxu0 0.0
        %899 = vmatpush.xpose.msra.mxu0 0.0
        %900 = vmatpush.xpose.msra.mxu0 0.0
        %901 = vmatpush.xpose.msra.mxu0 0.0
        %902 = vmatpush.xpose.msra.mxu0 0.0
        %903 = vmatpush.xpose.msra.mxu0 0.0
        %904 = vmatpush.xpose.msra.mxu0 0.0
        %905 = vmatpush.xpose.msra.mxu0 0.0
        %906 = vmatpush.xpose.msra.mxu0 0.0
        %907 = vmatpush.xpose.msra.mxu0 %v890
        %908 = vmatmul.f32.gmra.mxu0 %v888
        %v909 = vpop.f32.mrf.mxu0
        %v910 = vadd.f32 %v806, %v909
        %911 = vdwg.mxu0
        %912 = vrot.lane.b32.xlu0 %v798, 120
        %v913 = vpop.permute.xlu0 %912
        %v914 = vsel %vm809, %v798, 0
        %v916 = vsel %vm809, %v913, 0
        %918 = vmatpush.xpose.msra.mxu0 0.0
        %919 = vmatpush.xpose.msra.mxu0 0.0
        %920 = vmatpush.xpose.msra.mxu0 0.0
        %921 = vmatpush.xpose.msra.mxu0 0.0
        %922 = vmatpush.xpose.msra.mxu0 0.0
        %923 = vmatpush.xpose.msra.mxu0 0.0
        %924 = vmatpush.xpose.msra.mxu0 0.0
        %925 = vmatpush.xpose.msra.mxu0 0.0
        %926 = vmatpush.xpose.msra.mxu0 0.0
        %927 = vmatpush.xpose.msra.mxu0 0.0
        %928 = vmatpush.xpose.msra.mxu0 0.0
        %929 = vmatpush.xpose.msra.mxu0 0.0
        %930 = vmatpush.xpose.msra.mxu0 0.0
        %931 = vmatpush.xpose.msra.mxu0 0.0
        %932 = vmatpush.xpose.msra.mxu0 0.0
        %933 = vmatpush.xpose.msra.mxu0 %v916
        %934 = vmatmul.f32.gmra.mxu0 %v914
        %v935 = vpop.f32.mrf.mxu0
        %v936 = vadd.f32 %v805, %v935
        %937 = vdwg.mxu0
        %938 = vrot.lane.b32.xlu0 %v800, 120
        %v939 = vpop.permute.xlu0 %938
        %v940 = vsel %vm809, %v800, 0
        %v942 = vsel %vm809, %v939, 0
        %944 = vmatpush.xpose.msra.mxu0 0.0
        %945 = vmatpush.xpose.msra.mxu0 0.0
        %946 = vmatpush.xpose.msra.mxu0 0.0
        %947 = vmatpush.xpose.msra.mxu0 0.0
        %948 = vmatpush.xpose.msra.mxu0 0.0
        %949 = vmatpush.xpose.msra.mxu0 0.0
        %950 = vmatpush.xpose.msra.mxu0 0.0
        %951 = vmatpush.xpose.msra.mxu0 0.0
        %952 = vmatpush.xpose.msra.mxu0 0.0
        %953 = vmatpush.xpose.msra.mxu0 0.0
        %954 = vmatpush.xpose.msra.mxu0 0.0
        %955 = vmatpush.xpose.msra.mxu0 0.0
        %956 = vmatpush.xpose.msra.mxu0 0.0
        %957 = vmatpush.xpose.msra.mxu0 0.0
        %958 = vmatpush.xpose.msra.mxu0 0.0
        %959 = vmatpush.xpose.msra.mxu0 %v942
        %960 = vmatmul.f32.gmra.mxu0 %v940
        %v961 = vpop.f32.mrf.mxu0
        %v962 = vadd.f32 %v806, %v961
        %963 = vdwg.mxu0
        %964 = vrot.lane.b32.xlu0 %v802, 120
        %v965 = vpop.permute.xlu0 %964
        %v966 = vsel %vm809, %v802, 0
        %v968 = vsel %vm809, %v965, 0
        %970 = vmatpush.xpose.msra.mxu0 0.0
        %971 = vmatpush.xpose.msra.mxu0 0.0
        %972 = vmatpush.xpose.msra.mxu0 0.0
        %973 = vmatpush.xpose.msra.mxu0 0.0
        %974 = vmatpush.xpose.msra.mxu0 0.0
        %975 = vmatpush.xpose.msra.mxu0 0.0
        %976 = vmatpush.xpose.msra.mxu0 0.0
        %977 = vmatpush.xpose.msra.mxu0 0.0
        %978 = vmatpush.xpose.msra.mxu0 0.0
        %979 = vmatpush.xpose.msra.mxu0 0.0
        %980 = vmatpush.xpose.msra.mxu0 0.0
        %981 = vmatpush.xpose.msra.mxu0 0.0
        %982 = vmatpush.xpose.msra.mxu0 0.0
        %983 = vmatpush.xpose.msra.mxu0 0.0
        %984 = vmatpush.xpose.msra.mxu0 0.0
        %985 = vmatpush.xpose.msra.mxu0 %v968
        %986 = vmatmul.f32.gmra.mxu0 %v966
        %v987 = vpop.f32.mrf.mxu0
        %v988 = vadd.f32 %v805, %v987
        %989 = vdwg.mxu0
        %990 = vrot.lane.b32.xlu0 %v804, 120
        %v991 = vpop.permute.xlu0 %990
        %v992 = vsel %vm809, %v804, 0
        %v994 = vsel %vm809, %v991, 0
        %996 = vmatpush.xpose.msra.mxu0 0.0
        %997 = vmatpush.xpose.msra.mxu0 0.0
        %998 = vmatpush.xpose.msra.mxu0 0.0
        %999 = vmatpush.xpose.msra.mxu0 0.0
        %1000 = vmatpush.xpose.msra.mxu0 0.0
        %1001 = vmatpush.xpose.msra.mxu0 0.0
        %1002 = vmatpush.xpose.msra.mxu0 0.0
        %1003 = vmatpush.xpose.msra.mxu0 0.0
        %1004 = vmatpush.xpose.msra.mxu0 0.0
        %1005 = vmatpush.xpose.msra.mxu0 0.0
        %1006 = vmatpush.xpose.msra.mxu0 0.0
        %1007 = vmatpush.xpose.msra.mxu0 0.0
        %1008 = vmatpush.xpose.msra.mxu0 0.0
        %1009 = vmatpush.xpose.msra.mxu0 0.0
        %1010 = vmatpush.xpose.msra.mxu0 0.0
        %1011 = vmatpush.xpose.msra.mxu0 %v994
        %1012 = vmatmul.f32.gmra.mxu0 %v992
        %v1013 = vpop.f32.mrf.mxu0
        %v1014 = vadd.f32 %v806, %v1013
        %1015 = vdwg.mxu0
        %v1016 = vsel %vm809, %v832, -inf
        %1017 = vmax.xlane.f32.xlu0 %v1016
        %v1018 = vpop.xlane.xlu0 %1017
        %v1019 = vsel %vm809, %v858, -inf
        %1020 = vmax.xlane.f32.xlu0 %v1019
        %v1021 = vpop.xlane.xlu0 %1020
        %v1022 = vsel %vm809, %v884, -inf
        %1023 = vmax.xlane.f32.xlu0 %v1022
        %v1024 = vpop.xlane.xlu0 %1023
        %v1025 = vsel %vm809, %v910, -inf
        %1026 = vmax.xlane.f32.xlu0 %v1025
        %v1027 = vpop.xlane.xlu0 %1026
        %v1028 = vsel %vm809, %v936, -inf
        %1029 = vmax.xlane.f32.xlu0 %v1028
        %v1030 = vpop.xlane.xlu0 %1029
        %v1031 = vsel %vm809, %v962, -inf
        %1032 = vmax.xlane.f32.xlu0 %v1031
        %v1033 = vpop.xlane.xlu0 %1032
        %v1034 = vsel %vm809, %v988, -inf
        %1035 = vmax.xlane.f32.xlu0 %v1034
        %v1036 = vpop.xlane.xlu0 %1035
        %v1037 = vsel %vm809, %v1014, -inf
        %1038 = vmax.xlane.f32.xlu0 %v1037
        %v1039 = vpop.xlane.xlu0 %1038
        %v1040 = vsub.f32 %v832, %v1018
        %v1041 = vsub.f32 %v858, %v1021
        %v1042 = vsub.f32 %v884, %v1024
        %v1043 = vsub.f32 %v910, %v1027
        %v1044 = vsub.f32 %v936, %v1030
        %v1045 = vsub.f32 %v962, %v1033
        %v1046 = vsub.f32 %v988, %v1036
        %v1047 = vsub.f32 %v1014, %v1039
        %v1048 = vmul.f32 %v1040, 1.442695
        %v1049 = vpow.pop %v1048
        %v1050 = vmul.f32 %v1041, 1.442695
        %v1051 = vpow.pop %v1050
        %v1052 = vmul.f32 %v1042, 1.442695
        %v1053 = vpow.pop %v1052
        %v1054 = vmul.f32 %v1043, 1.442695
        %v1055 = vpow.pop %v1054
        %v1056 = vmul.f32 %v1044, 1.442695
        %v1057 = vpow.pop %v1056
        %v1058 = vmul.f32 %v1045, 1.442695
        %v1059 = vpow.pop %v1058
        %v1060 = vmul.f32 %v1046, 1.442695
        %v1061 = vpow.pop %v1060
        %v1062 = vmul.f32 %v1047, 1.442695
        %v1063 = vpow.pop %v1062
        %v1064 = vsel %vm809, %v1049, 0.0
        %1065 = vadd.xlane.f32.xlu0 %v1064
        %v1066 = vpop.xlane.xlu0 %1065
        %v1067 = vsel %vm809, %v1051, 0.0
        %1068 = vadd.xlane.f32.xlu0 %v1067
        %v1069 = vpop.xlane.xlu0 %1068
        %v1070 = vsel %vm809, %v1053, 0.0
        %1071 = vadd.xlane.f32.xlu0 %v1070
        %v1072 = vpop.xlane.xlu0 %1071
        %v1073 = vsel %vm809, %v1055, 0.0
        %1074 = vadd.xlane.f32.xlu0 %v1073
        %v1075 = vpop.xlane.xlu0 %1074
        %v1076 = vsel %vm809, %v1057, 0.0
        %1077 = vadd.xlane.f32.xlu0 %v1076
        %v1078 = vpop.xlane.xlu0 %1077
        %v1079 = vsel %vm809, %v1059, 0.0
        %1080 = vadd.xlane.f32.xlu0 %v1079
        %v1081 = vpop.xlane.xlu0 %1080
        %v1082 = vsel %vm809, %v1061, 0.0
        %1083 = vadd.xlane.f32.xlu0 %v1082
        %v1084 = vpop.xlane.xlu0 %1083
        %v1085 = vsel %vm809, %v1063, 0.0
        %1086 = vadd.xlane.f32.xlu0 %v1085
        %v1087 = vpop.xlane.xlu0 %1086
        %v1088 = vrcp.pop %v1066
        %v1089 = vrcp.pop %v1069
        %v1090 = vrcp.pop %v1072
        %v1091 = vrcp.pop %v1075
        %v1092 = vrcp.pop %v1078
        %v1093 = vrcp.pop %v1081
        %v1094 = vrcp.pop %v1084
        %v1095 = vrcp.pop %v1087
        %v1096 = vmul.f32 %v1049, %v1088
        %v1097 = vmul.f32 %v1051, %v1089
        %v1098 = vmul.f32 %v1053, %v1090
        %v1099 = vmul.f32 %v1055, %v1091
        %v1100 = vmul.f32 %v1057, %v1092
        %v1101 = vmul.f32 %v1059, %v1093
        %v1102 = vmul.f32 %v1061, %v1094
        %v1103 = vmul.f32 %v1063, %v1095
        %1104 = vrot.lane.b32.xlu0 %v786, 112
        %v1105 = vpop.permute.xlu0 %1104
        %v1108 = vsel %vm809, %v1096, 0
        %1110 = vmatpush.msra.mxu0 0.0
        %1111 = vmatpush.msra.mxu0 0.0
        %1112 = vmatpush.msra.mxu0 0.0
        %1113 = vmatpush.msra.mxu0 0.0
        %1114 = vmatpush.msra.mxu0 0.0
        %1115 = vmatpush.msra.mxu0 0.0
        %1116 = vmatpush.msra.mxu0 0.0
        %1117 = vmatpush.msra.mxu0 0.0
        %1118 = vmatpush.msra.mxu0 0.0
        %1119 = vmatpush.msra.mxu0 0.0
        %1120 = vmatpush.msra.mxu0 0.0
        %1121 = vmatpush.msra.mxu0 0.0
        %1122 = vmatpush.msra.mxu0 0.0
        %1123 = vmatpush.msra.mxu0 0.0
        %1124 = vmatpush.msra.mxu0 0.0
        %1125 = vmatpush.msra.mxu0 %v1105
        %1126 = vmatmul.f32.gmra.mxu0 %v1108
        %v1127 = vpop.f32.mrf.mxu0
        %v1128 = vadd.f32 0.0, %v1127
        %1129 = vdwg.mxu0
        %1130 = vrot.lane.b32.xlu0 %v789, 112
        %v1131 = vpop.permute.xlu0 %1130
        %v1134 = vsel %vm809, %v1097, 0
        %1136 = vmatpush.msra.mxu0 0.0
        %1137 = vmatpush.msra.mxu0 0.0
        %1138 = vmatpush.msra.mxu0 0.0
        %1139 = vmatpush.msra.mxu0 0.0
        %1140 = vmatpush.msra.mxu0 0.0
        %1141 = vmatpush.msra.mxu0 0.0
        %1142 = vmatpush.msra.mxu0 0.0
        %1143 = vmatpush.msra.mxu0 0.0
        %1144 = vmatpush.msra.mxu0 0.0
        %1145 = vmatpush.msra.mxu0 0.0
        %1146 = vmatpush.msra.mxu0 0.0
        %1147 = vmatpush.msra.mxu0 0.0
        %1148 = vmatpush.msra.mxu0 0.0
        %1149 = vmatpush.msra.mxu0 0.0
        %1150 = vmatpush.msra.mxu0 0.0
        %1151 = vmatpush.msra.mxu0 %v1131
        %1152 = vmatmul.f32.gmra.mxu0 %v1134
        %v1153 = vpop.f32.mrf.mxu0
        %v1154 = vadd.f32 0.0, %v1153
        %1155 = vdwg.mxu0
        %1156 = vrot.lane.b32.xlu0 %v794, 112
        %v1157 = vpop.permute.xlu0 %1156
        %v1160 = vsel %vm809, %v1098, 0
        %1162 = vmatpush.msra.mxu0 0.0
        %1163 = vmatpush.msra.mxu0 0.0
        %1164 = vmatpush.msra.mxu0 0.0
        %1165 = vmatpush.msra.mxu0 0.0
        %1166 = vmatpush.msra.mxu0 0.0
        %1167 = vmatpush.msra.mxu0 0.0
        %1168 = vmatpush.msra.mxu0 0.0
        %1169 = vmatpush.msra.mxu0 0.0
        %1170 = vmatpush.msra.mxu0 0.0
        %1171 = vmatpush.msra.mxu0 0.0
        %1172 = vmatpush.msra.mxu0 0.0
        %1173 = vmatpush.msra.mxu0 0.0
        %1174 = vmatpush.msra.mxu0 0.0
        %1175 = vmatpush.msra.mxu0 0.0
        %1176 = vmatpush.msra.mxu0 0.0
        %1177 = vmatpush.msra.mxu0 %v1157
        %1178 = vmatmul.f32.gmra.mxu0 %v1160
        %v1179 = vpop.f32.mrf.mxu0
        %v1180 = vadd.f32 0.0, %v1179
        %1181 = vdwg.mxu0
        %1182 = vrot.lane.b32.xlu0 %v796, 112
        %v1183 = vpop.permute.xlu0 %1182
        %v1186 = vsel %vm809, %v1099, 0
        %1188 = vmatpush.msra.mxu0 0.0
        %1189 = vmatpush.msra.mxu0 0.0
        %1190 = vmatpush.msra.mxu0 0.0
        %1191 = vmatpush.msra.mxu0 0.0
        %1192 = vmatpush.msra.mxu0 0.0
        %1193 = vmatpush.msra.mxu0 0.0
        %1194 = vmatpush.msra.mxu0 0.0
        %1195 = vmatpush.msra.mxu0 0.0
        %1196 = vmatpush.msra.mxu0 0.0
        %1197 = vmatpush.msra.mxu0 0.0
        %1198 = vmatpush.msra.mxu0 0.0
        %1199 = vmatpush.msra.mxu0 0.0
        %1200 = vmatpush.msra.mxu0 0.0
        %1201 = vmatpush.msra.mxu0 0.0
        %1202 = vmatpush.msra.mxu0 0.0
        %1203 = vmatpush.msra.mxu0 %v1183
        %1204 = vmatmul.f32.gmra.mxu0 %v1186
        %v1205 = vpop.f32.mrf.mxu0
        %v1206 = vadd.f32 0.0, %v1205
        %1207 = vdwg.mxu0
        %1208 = vrot.lane.b32.xlu0 %v798, 112
        %v1209 = vpop.permute.xlu0 %1208
        %v1212 = vsel %vm809, %v1100, 0
        %1214 = vmatpush.msra.mxu0 0.0
        %1215 = vmatpush.msra.mxu0 0.0
        %1216 = vmatpush.msra.mxu0 0.0
        %1217 = vmatpush.msra.mxu0 0.0
        %1218 = vmatpush.msra.mxu0 0.0
        %1219 = vmatpush.msra.mxu0 0.0
        %1220 = vmatpush.msra.mxu0 0.0
        %1221 = vmatpush.msra.mxu0 0.0
        %1222 = vmatpush.msra.mxu0 0.0
        %1223 = vmatpush.msra.mxu0 0.0
        %1224 = vmatpush.msra.mxu0 0.0
        %1225 = vmatpush.msra.mxu0 0.0
        %1226 = vmatpush.msra.mxu0 0.0
        %1227 = vmatpush.msra.mxu0 0.0
        %1228 = vmatpush.msra.mxu0 0.0
        %1229 = vmatpush.msra.mxu0 %v1209
        %1230 = vmatmul.f32.gmra.mxu0 %v1212
        %v1231 = vpop.f32.mrf.mxu0
        %v1232 = vadd.f32 0.0, %v1231
        %1233 = vdwg.mxu0
        %1234 = vrot.lane.b32.xlu0 %v800, 112
        %v1235 = vpop.permute.xlu0 %1234
        %v1238 = vsel %vm809, %v1101, 0
        %1240 = vmatpush.msra.mxu0 0.0
        %1241 = vmatpush.msra.mxu0 0.0
        %1242 = vmatpush.msra.mxu0 0.0
        %1243 = vmatpush.msra.mxu0 0.0
        %1244 = vmatpush.msra.mxu0 0.0
        %1245 = vmatpush.msra.mxu0 0.0
        %1246 = vmatpush.msra.mxu0 0.0
        %1247 = vmatpush.msra.mxu0 0.0
        %1248 = vmatpush.msra.mxu0 0.0
        %1249 = vmatpush.msra.mxu0 0.0
        %1250 = vmatpush.msra.mxu0 0.0
        %1251 = vmatpush.msra.mxu0 0.0
        %1252 = vmatpush.msra.mxu0 0.0
        %1253 = vmatpush.msra.mxu0 0.0
        %1254 = vmatpush.msra.mxu0 0.0
        %1255 = vmatpush.msra.mxu0 %v1235
        %1256 = vmatmul.f32.gmra.mxu0 %v1238
        %v1257 = vpop.f32.mrf.mxu0
        %v1258 = vadd.f32 0.0, %v1257
        %1259 = vdwg.mxu0
        %1260 = vrot.lane.b32.xlu0 %v802, 112
        %v1261 = vpop.permute.xlu0 %1260
        %v1264 = vsel %vm809, %v1102, 0
        %1266 = vmatpush.msra.mxu0 0.0
        %1267 = vmatpush.msra.mxu0 0.0
        %1268 = vmatpush.msra.mxu0 0.0
        %1269 = vmatpush.msra.mxu0 0.0
        %1270 = vmatpush.msra.mxu0 0.0
        %1271 = vmatpush.msra.mxu0 0.0
        %1272 = vmatpush.msra.mxu0 0.0
        %1273 = vmatpush.msra.mxu0 0.0
        %1274 = vmatpush.msra.mxu0 0.0
        %1275 = vmatpush.msra.mxu0 0.0
        %1276 = vmatpush.msra.mxu0 0.0
        %1277 = vmatpush.msra.mxu0 0.0
        %1278 = vmatpush.msra.mxu0 0.0
        %1279 = vmatpush.msra.mxu0 0.0
        %1280 = vmatpush.msra.mxu0 0.0
        %1281 = vmatpush.msra.mxu0 %v1261
        %1282 = vmatmul.f32.gmra.mxu0 %v1264
        %v1283 = vpop.f32.mrf.mxu0
        %v1284 = vadd.f32 0.0, %v1283
        %1285 = vdwg.mxu0
        %1286 = vrot.lane.b32.xlu0 %v804, 112
        %v1287 = vpop.permute.xlu0 %1286
        %v1290 = vsel %vm809, %v1103, 0
        %1292 = vmatpush.msra.mxu0 0.0
        %1293 = vmatpush.msra.mxu0 0.0
        %1294 = vmatpush.msra.mxu0 0.0
        %1295 = vmatpush.msra.mxu0 0.0
        %1296 = vmatpush.msra.mxu0 0.0
        %1297 = vmatpush.msra.mxu0 0.0
        %1298 = vmatpush.msra.mxu0 0.0
        %1299 = vmatpush.msra.mxu0 0.0
        %1300 = vmatpush.msra.mxu0 0.0
        %1301 = vmatpush.msra.mxu0 0.0
        %1302 = vmatpush.msra.mxu0 0.0
        %1303 = vmatpush.msra.mxu0 0.0
        %1304 = vmatpush.msra.mxu0 0.0
        %1305 = vmatpush.msra.mxu0 0.0
        %1306 = vmatpush.msra.mxu0 0.0
        %1307 = vmatpush.msra.mxu0 %v1287
        %1308 = vmatmul.f32.gmra.mxu0 %v1290
        %v1309 = vpop.f32.mrf.mxu0
        %v1310 = vadd.f32 0.0, %v1309
        %1311 = vdwg.mxu0
        %1314 = vrot.lane.b32.xlu0 %v1180, 8
        %v1315 = vpop.permute.xlu0 %1314
        %1316 = vrot.lane.b32.xlu0 %v1206, 8
        %v1317 = vpop.permute.xlu0 %1316
        %1322 = vrot.lane.b32.xlu0 %v1232, 16
        %v1323 = vpop.permute.xlu0 %1322
        %1324 = vrot.lane.b32.xlu0 %v1258, 16
        %v1325 = vpop.permute.xlu0 %1324
        %1330 = vrot.lane.b32.xlu0 %v1284, 24
        %v1331 = vpop.permute.xlu0 %1330
        %1332 = vrot.lane.b32.xlu0 %v1310, 24
        %v1333 = vpop.permute.xlu0 %1332
        %v1336 = vsel %vm809, %v1128, %v1315
        %v1337 = vsel %vm809, %v1154, %v1317
        %vm1338 = vcmask 130048
        %v1339 = vsel %vm1338, %v1336, %v1323
        %v1340 = vsel %vm1338, %v1337, %v1325
        %vm1341 = vcmask 195584
        %v1342 = vsel %vm1341, %v1339, %v1331
        %v1343 = vsel %vm1341, %v1340, %v1333
        %v1344 = vld [vmem:[%s709] sm:$0xff]
        %v1345 = vld [vmem:[%s709 + $0x8] sm:$0xff]
        %v1346 = vld [vmem:[%s709 + $0x10] sm:$0xff]
        %v1347 = vld [vmem:[%s709 + $0x18] sm:$0xff]
        %v1348 = vld [vmem:[%s712] sm:$0x1]
        %v1350 = vperm.slane %v1348, 0
        %v1353 = vsel %vm761, %v1342, 0
        %v1356 = vsel %vm761, %v1343, 0
        %1358 = vmatpush.msra.mxu0 0.0
        %1359 = vmatpush.msra.mxu0 0.0
        %1360 = vmatpush.msra.mxu0 0.0
        %1361 = vmatpush.msra.mxu0 0.0
        %1362 = vmatpush.msra.mxu0 0.0
        %1363 = vmatpush.msra.mxu0 0.0
        %1364 = vmatpush.msra.mxu0 0.0
        %1365 = vmatpush.msra.mxu0 0.0
        %1366 = vmatpush.msra.mxu0 0.0
        %1367 = vmatpush.msra.mxu0 0.0
        %1368 = vmatpush.msra.mxu0 0.0
        %1369 = vmatpush.msra.mxu0 0.0
        %1370 = vmatpush.msra.mxu0 %v1347
        %1371 = vmatpush.msra.mxu0 %v1346
        %1372 = vmatpush.msra.mxu0 %v1345
        %1373 = vmatpush.msra.mxu0 %v1344
        %1374 = vmatmul.f32.gmra.mxu0 %v1353
        %v1375 = vpop.f32.mrf.mxu0
        %v1376 = vadd.f32 %v1350, %v1375
        %1377 = vmatmul.f32.gmra.mxu0 %v1356
        %v1378 = vpop.f32.mrf.mxu0
        %v1379 = vadd.f32 %v1350, %v1378
        %1380 = vdwg.mxu0
        %v1381 = vadd.f32 %v1376, %v751
        %v1382 = vadd.f32 %v1379, %v752
        %v1383 = vld [vmem:[%s715] sm:$0x1]
        %v1384 = vld [vmem:[%s718] sm:$0x1]
        %v1385 = vsel %vm761, %v1381, 0.0
        %1386 = vadd.xlane.f32.xlu0 %v1385
        %v1387 = vpop.xlane.xlu0 %1386
        %v1388 = vsel %vm761, %v1382, 0.0
        %1389 = vadd.xlane.f32.xlu0 %v1388
        %v1390 = vpop.xlane.xlu0 %1389
        %v1391 = vrcp.pop 32.0
        %v1392 = vmul.f32 32.0, %v1391
        %v1393 = vsub.f32 1.0, %v1392
        %v1394 = vmul.f32 %v1391, %v1393
        %v1395 = vadd.f32 %v1391, %v1394
        %vm1396 = vweird.f32 %v1391
        %v1397 = vsel %vm1396, %v1391, %v1395
        %v1398 = vmul.f32 %v1387, %v1397
        %v1399 = vmul.f32 %v1390, %v1397
        %v1400 = vsub.f32 %v1381, %v1398
        %v1401 = vsub.f32 %v1382, %v1399
        %v1402 = vmul.f32 %v1400, %v1400
        %v1403 = vmul.f32 %v1401, %v1401
        %v1404 = vsel %vm761, %v1402, 0.0
        %1405 = vadd.xlane.f32.xlu0 %v1404
        %v1406 = vpop.xlane.xlu0 %1405
        %v1407 = vsel %vm761, %v1403, 0.0
        %1408 = vadd.xlane.f32.xlu0 %v1407
        %v1409 = vpop.xlane.xlu0 %1408
        %v1410 = vmul.f32 %v1406, %v1397
        %v1411 = vmul.f32 %v1409, %v1397
        %v1412 = vadd.f32 %v1410, 1e-05
        %v1413 = vadd.f32 %v1411, 1e-05
        %v1414 = vrsqrt.pop %v1412
        %v1415 = vmul.f32 %v1414, %v1412
        %v1416 = vmul.f32 %v1415, %v1414
        %v1417 = vmul.f32 0.5, %v1416
        %v1418 = vsub.f32 1.5, %v1417
        %v1419 = vmul.f32 %v1414, %v1418
        %vm1420 = vweird.f32 %v1412
        %vm1421 = vweird.f32 %v1414
        %vm1422 = vmor %vm1420, %vm1421
        %v1423 = vsel %vm1422, %v1414, %v1419
        %v1424 = vrsqrt.pop %v1413
        %v1425 = vmul.f32 %v1424, %v1413
        %v1426 = vmul.f32 %v1425, %v1424
        %v1427 = vmul.f32 0.5, %v1426
        %v1428 = vsub.f32 1.5, %v1427
        %v1429 = vmul.f32 %v1424, %v1428
        %vm1430 = vweird.f32 %v1413
        %vm1431 = vweird.f32 %v1424
        %vm1432 = vmor %vm1430, %vm1431
        %v1433 = vsel %vm1432, %v1424, %v1429
        %v1434 = vmul.f32 %v1400, %v1423
        %v1435 = vmul.f32 %v1401, %v1433
        %v1437 = vperm.slane %v1383, 0
        %v1439 = vmul.f32 %v1434, %v1437
        %v1440 = vmul.f32 %v1435, %v1437
        %v1442 = vperm.slane %v1384, 0
        %v1444 = vadd.f32 %v1439, %v1442
        %v1445 = vadd.f32 %v1440, %v1442
        %v1446 = vld [vmem:[%s723] sm:$0xff]
        %v1447 = vld [vmem:[%s723 + $0x8] sm:$0xff]
        %v1448 = vld [vmem:[%s723 + $0x10] sm:$0xff]
        %v1449 = vld [vmem:[%s723 + $0x18] sm:$0xff]
        %v1450 = vld [vmem:[%s726] sm:$0x1]
        %v1452 = vperm.slane %v1450, 0
        %v1455 = vsel %vm761, %v1444, 0
        %v1458 = vsel %vm761, %v1445, 0
        %1460 = vmatpush.msra.mxu0 0.0
        %1461 = vmatpush.msra.mxu0 0.0
        %1462 = vmatpush.msra.mxu0 0.0
        %1463 = vmatpush.msra.mxu0 0.0
        %1464 = vmatpush.msra.mxu0 0.0
        %1465 = vmatpush.msra.mxu0 0.0
        %1466 = vmatpush.msra.mxu0 0.0
        %1467 = vmatpush.msra.mxu0 0.0
        %1468 = vmatpush.msra.mxu0 0.0
        %1469 = vmatpush.msra.mxu0 0.0
        %1470 = vmatpush.msra.mxu0 0.0
        %1471 = vmatpush.msra.mxu0 0.0
        %1472 = vmatpush.msra.mxu0 %v1449
        %1473 = vmatpush.msra.mxu0 %v1448
        %1474 = vmatpush.msra.mxu0 %v1447
        %1475 = vmatpush.msra.mxu0 %v1446
        %1476 = vmatmul.f32.gmra.mxu0 %v1455
        %v1477 = vpop.f32.mrf.mxu0
        %v1478 = vadd.f32 %v1452, %v1477
        %1479 = vmatmul.f32.gmra.mxu0 %v1458
        %v1480 = vpop.f32.mrf.mxu0
        %v1481 = vadd.f32 %v1452, %v1480
        %1482 = vdwg.mxu0
        %v1483 = vmax.f32 %v1478, 0.0
        %v1484 = vmax.f32 %v1481, 0.0
        %v1485 = vld [vmem:[%s731] sm:$0xff]
        %v1486 = vld [vmem:[%s731 + $0x8] sm:$0xff]
        %v1487 = vld [vmem:[%s731 + $0x10] sm:$0xff]
        %v1488 = vld [vmem:[%s731 + $0x18] sm:$0xff]
        %v1489 = vld [vmem:[%s731 + $0x20] sm:$0xff]
        %v1490 = vld [vmem:[%s731 + $0x28] sm:$0xff]
        %v1491 = vld [vmem:[%s731 + $0x30] sm:$0xff]
        %v1492 = vld [vmem:[%s731 + $0x38] sm:$0xff]
        %v1493 = vld [vmem:[%s734] sm:$0x1]
        %v1495 = vperm.slane %v1493, 0
        %vm1497 = vcmask 523264
        %v1499 = vsel %vm1497, %v1483, 0
        %v1502 = vsel %vm1497, %v1484, 0
        %1504 = vmatpush.msra.mxu0 0.0
        %1505 = vmatpush.msra.mxu0 0.0
        %1506 = vmatpush.msra.mxu0 0.0
        %1507 = vmatpush.msra.mxu0 0.0
        %1508 = vmatpush.msra.mxu0 0.0
        %1509 = vmatpush.msra.mxu0 0.0
        %1510 = vmatpush.msra.mxu0 0.0
        %1511 = vmatpush.msra.mxu0 0.0
        %1512 = vmatpush.msra.mxu0 %v1492
        %1513 = vmatpush.msra.mxu0 %v1491
        %1514 = vmatpush.msra.mxu0 %v1490
        %1515 = vmatpush.msra.mxu0 %v1489
        %1516 = vmatpush.msra.mxu0 %v1488
        %1517 = vmatpush.msra.mxu0 %v1487
        %1518 = vmatpush.msra.mxu0 %v1486
        %1519 = vmatpush.msra.mxu0 %v1485
        %1520 = vmatmul.f32.gmra.mxu0 %v1499
        %v1521 = vpop.f32.mrf.mxu0
        %v1522 = vadd.f32 %v1495, %v1521
        %1523 = vmatmul.f32.gmra.mxu0 %v1502
        %v1524 = vpop.f32.mrf.mxu0
        %v1525 = vadd.f32 %v1495, %v1524
        %1526 = vdwg.mxu0
        %v1527 = vadd.f32 %v1522, %v1444
        %v1528 = vadd.f32 %v1525, %v1445
        %v1529 = vld [vmem:[%s737] sm:$0x1]
        %v1530 = vld [vmem:[%s740] sm:$0x1]
        %v1531 = vsel %vm761, %v1527, 0.0
        %1532 = vadd.xlane.f32.xlu0 %v1531
        %v1533 = vpop.xlane.xlu0 %1532
        %v1534 = vsel %vm761, %v1528, 0.0
        %1535 = vadd.xlane.f32.xlu0 %v1534
        %v1536 = vpop.xlane.xlu0 %1535
        %v1537 = vmul.f32 %v1533, %v1397
        %v1538 = vmul.f32 %v1536, %v1397
        %v1539 = vsub.f32 %v1527, %v1537
        %v1540 = vsub.f32 %v1528, %v1538
        %v1541 = vmul.f32 %v1539, %v1539
        %v1542 = vmul.f32 %v1540, %v1540
        %v1543 = vsel %vm761, %v1541, 0.0
        %1544 = vadd.xlane.f32.xlu0 %v1543
        %v1545 = vpop.xlane.xlu0 %1544
        %v1546 = vsel %vm761, %v1542, 0.0
        %1547 = vadd.xlane.f32.xlu0 %v1546
        %v1548 = vpop.xlane.xlu0 %1547
        %v1549 = vmul.f32 %v1545, %v1397
        %v1550 = vmul.f32 %v1548, %v1397
        %v1551 = vadd.f32 %v1549, 1e-05
        %v1552 = vadd.f32 %v1550, 1e-05
        %v1553 = vrsqrt.pop %v1551
        %v1554 = vmul.f32 %v1553, %v1551
        %v1555 = vmul.f32 %v1554, %v1553
        %v1556 = vmul.f32 0.5, %v1555
        %v1557 = vsub.f32 1.5, %v1556
        %v1558 = vmul.f32 %v1553, %v1557
        %vm1559 = vweird.f32 %v1551
        %vm1560 = vweird.f32 %v1553
        %vm1561 = vmor %vm1559, %vm1560
        %v1562 = vsel %vm1561, %v1553, %v1558
        %v1563 = vrsqrt.pop %v1552
        %v1564 = vmul.f32 %v1563, %v1552
        %v1565 = vmul.f32 %v1564, %v1563
        %v1566 = vmul.f32 0.5, %v1565
        %v1567 = vsub.f32 1.5, %v1566
        %v1568 = vmul.f32 %v1563, %v1567
        %vm1569 = vweird.f32 %v1552
        %vm1570 = vweird.f32 %v1563
        %vm1571 = vmor %vm1569, %vm1570
        %v1572 = vsel %vm1571, %v1563, %v1568
        %v1573 = vmul.f32 %v1539, %v1562
        %v1574 = vmul.f32 %v1540, %v1572
        %v1576 = vperm.slane %v1529, 0
        %v1578 = vmul.f32 %v1573, %v1576
        %v1579 = vmul.f32 %v1574, %v1576
        %v1581 = vperm.slane %v1530, 0
        %v1583 = vadd.f32 %v1578, %v1581
        %v1584 = vadd.f32 %v1579, %v1581
        %1585 = vst.msk [vmem:[#allocation2] sm:$0xff] %vm761, %v1583
        %1586 = vst.msk [vmem:[#allocation2 + $0x8] sm:$0xff] %vm761, %v1584
        %p1587 = scmp.eq.s32.totalorder %s33, 1
        // Predicated region
        $region89: #{encoder_forward.1} parent=83 // pred_check
          %p1588 = pneg %p1587
        $region90: #{encoder_forward.1} parent=83 // pred_check_branch
          %1590 = sbr.rel (%p1588) target = $region92
        $region91: #{encoder_forward.1} parent=83 // pred_region
          %v1591 = vld [vmem:[%s14] sm:$0x1]
          %v1592 = vld [vmem:[%s15] sm:$0x1]
          %v1593 = vsel %vm761, %v1583, 0.0
          %1594 = vadd.xlane.f32.xlu0 %v1593
          %v1595 = vpop.xlane.xlu0 %1594
          %v1596 = vsel %vm761, %v1584, 0.0
          %1597 = vadd.xlane.f32.xlu0 %v1596
          %v1598 = vpop.xlane.xlu0 %1597
          %v1599 = vmul.f32 %v1595, %v1397
          %v1600 = vmul.f32 %v1598, %v1397
          %v1601 = vsub.f32 %v1583, %v1599
          %v1602 = vsub.f32 %v1584, %v1600
          %v1603 = vmul.f32 %v1601, %v1601
          %v1604 = vmul.f32 %v1602, %v1602
          %v1605 = vsel %vm761, %v1603, 0.0
          %1606 = vadd.xlane.f32.xlu0 %v1605
          %v1607 = vpop.xlane.xlu0 %1606
          %v1608 = vsel %vm761, %v1604, 0.0
          %1609 = vadd.xlane.f32.xlu0 %v1608
          %v1610 = vpop.xlane.xlu0 %1609
          %v1611 = vmul.f32 %v1607, %v1397
          %v1612 = vmul.f32 %v1610, %v1397
          %v1613 = vadd.f32 %v1611, 1e-05
          %v1614 = vadd.f32 %v1612, 1e-05
          %v1615 = vrsqrt.pop %v1613
          %v1616 = vmul.f32 %v1615, %v1613
          %v1617 = vmul.f32 %v1616, %v1615
          %v1618 = vmul.f32 0.5, %v1617
          %v1619 = vsub.f32 1.5, %v1618
          %v1620 = vmul.f32 %v1615, %v1619
          %vm1621 = vweird.f32 %v1613
          %vm1622 = vweird.f32 %v1615
          %vm1623 = vmor %vm1621, %vm1622
          %v1624 = vsel %vm1623, %v1615, %v1620
          %v1625 = vrsqrt.pop %v1614
          %v1626 = vmul.f32 %v1625, %v1614
          %v1627 = vmul.f32 %v1626, %v1625
          %v1628 = vmul.f32 0.5, %v1627
          %v1629 = vsub.f32 1.5, %v1628
          %v1630 = vmul.f32 %v1625, %v1629
          %vm1631 = vweird.f32 %v1614
          %vm1632 = vweird.f32 %v1625
          %vm1633 = vmor %vm1631, %vm1632
          %v1634 = vsel %vm1633, %v1625, %v1630
          %v1635 = vmul.f32 %v1601, %v1624
          %v1636 = vmul.f32 %v1602, %v1634
          %v1638 = vperm.slane %v1591, 0
          %v1640 = vmul.f32 %v1635, %v1638
          %v1641 = vmul.f32 %v1636, %v1638
          %v1643 = vperm.slane %v1592, 0
          %v1645 = vadd.f32 %v1640, %v1643
          %v1646 = vadd.f32 %v1641, %v1643
          %1647 = vst.msk [vmem:[#allocation3] sm:$0xff] %vm761, %v1645
          %1648 = vst.msk [vmem:[#allocation3 + $0x8] sm:$0xff] %vm761, %v1646
        $region92: #{encoder_forward.1} parent=83 // pred_fallthru
          _
        // Predicated region
        $region93: #{encoder_forward.1} parent=83 // pred_check
          %p1649 = pneg %p464
        $region94: #{encoder_forward.1} parent=83 // pred_check_branch
          %1651 = sbr.rel (%p1649) target = $region96
        $region95: #{encoder_forward.1} parent=83 // pred_region
          %s1652 = smul.u32 2, %s32
          %1654 = vsyncadd [#allocation4], 0
          %s1655 = smul.addr %s1652, 8
          %s1656 = scalar_lea.hbm %s16, %s1655
          %s1657 = sshll.u32 [#allocation3], 4
          %s1658 = int_to_ptr.vmem [resolvable:$true] %s1657
          %s1659 = sshll.u32 %s1656, 4
          %s1660 = int_to_ptr.hbm [resolvable:$true] %s1659
          %1665 = dma.vmem_to_hbm [thread:$0]  %s1658, 256, %s1660, [#allocation4], 128, 128, 8
        $region96: #{encoder_forward.1} parent=83 // pred_fallthru
          _
        // Predicated region
        $region97: #{encoder_forward.1} parent=83 // pred_check
          %p1666 = pneg %p464
        $region98: #{encoder_forward.1} parent=83 // pred_check_branch
          %1668 = sbr.rel (%p1666) target = $region100
        $region99: #{encoder_forward.1} parent=83 // pred_region
          %1670 = dma.done [#allocation4], 256
        $region100: #{encoder_forward.1} parent=83 // pred_fallthru
          _
      $region84: #{encoder_forward.1} parent=5 // pred_fallthru
        _
      %p1671 = scmp.le.s32.totalorder 2, %s23
      // Predicated region
      $region101: #{encoder_forward.1} parent=5 // pred_check
        %p1672 = pneg %p1671
      $region102: #{encoder_forward.1} parent=5 // pred_check_branch
        %1674 = sbr.rel (%p1672) target = $region104
      $region103: #{encoder_forward.1} parent=5 // pred_region
        %s1675 = ssub.s32 %s23, 2
      $region104: #{encoder_forward.1} parent=5 // pred_fallthru
        _
    $region6: #{encoder_forward.1} parent=1 // loop_footer
      %s27 = sadd.s32 1, %s23
    $region7: #{encoder_forward.1} parent=1 // loop_footer_branch
      %22 = sbr.rel target = $region3
    $region8: #{encoder_forward.1} parent=1 // loop_exit
      _
    %1676 = vsyncpa [#allocation4], 1
    %s1677 = scalar_lea.sflag [#allocation4], 1
    %1678 = vsyncpa %s1677, 1

</llo_original>
